<compile_context>
chip_gen: v7x
topology: tpu7x:2x2x1
jax: 0.10.0
libtpu: 0.0.40
codegen_flags: <defaults>
</compile_context>

<pallas_src>
import jax
import jax.numpy as jnp
from jax.experimental import pallas as pl
from jax.experimental.pallas import tpu as pltpu


# ------------------------------ shared math -------------------------------- #
def _layer_norm_f32(h, gamma, beta, eps=1e-5):
    """Single-pass LayerNorm (f32): var = E[x^2] - mu^2, fused scale."""
    inv_n = 1.0 / h.shape[-1]
    s1 = jnp.sum(h, axis=-1, keepdims=True)
    s2 = jnp.sum(h * h, axis=-1, keepdims=True)
    mu = s1 * inv_n
    var = s2 * inv_n - mu * mu
    scale = gamma * jax.lax.rsqrt(var + eps)
    return (h - mu) * scale + beta


def _layer_norm_ref(h, gamma, beta, eps=1e-5):
    """Two-pass reference LayerNorm (independent of the kernel's formulation)."""
    mu = jnp.mean(h, axis=-1, keepdims=True)
    var = jnp.mean((h - mu) ** 2, axis=-1, keepdims=True)
    return (h - mu) * jax.lax.rsqrt(var + eps) * gamma + beta


# ----------------------------- Pallas kernel ------------------------------- #
def bronet_critic_kernel(
    x_ref,      # [TB, S+A]  f32  concatenated state || action
    pw_ref,     # [S+A, H]   bf16 projection weight
    pln_ref,    # [8, H]     f32  rows: pb, pg, pbt, (pad x5)
    w1_ref,     # [L, H, H]  bf16 block first Linear
    w2_ref,     # [L, H, H]  bf16 block second Linear
    ln_ref,     # [L, 8, H]  f32  rows: b1, g1, bt1, b2, g2, bt2, (pad x2)
    fw_ref,     # [H, O]     bf16 final Linear
    fb_ref,     # [1, O]     f32
    out_ref,    # [TB, O]    f32
):
    # ---- projection: Linear -> LayerNorm -> ReLU (single fused matmul) ----
    pln = pln_ref[...]
    h = jnp.dot(x_ref[...].astype(jnp.bfloat16), pw_ref[...],
                preferred_element_type=jnp.float32) + pln[0:1, :]
    h = jnp.maximum(_layer_norm_f32(h, pln[1:2, :], pln[2:3, :]), 0.0)

    # ---- BroNet residual blocks: weights resident, loop fully unrolled ----
    num_layers = w1_ref.shape[0]

    def block(l, h):
        ln = ln_ref[l]                      # [8, H]: b1, g1, bt1, b2, g2, bt2
        o = jnp.dot(h.astype(jnp.bfloat16), w1_ref[l],
                    preferred_element_type=jnp.float32) + ln[0:1, :]
        o = jnp.maximum(_layer_norm_f32(o, ln[1:2, :], ln[2:3, :]), 0.0)
        o = jnp.dot(o.astype(jnp.bfloat16), w2_ref[l],
                    preferred_element_type=jnp.float32) + ln[3:4, :]
        o = _layer_norm_f32(o, ln[4:5, :], ln[5:6, :])
        return h + o

    h = jax.lax.fori_loop(0, num_layers, block, h, unroll=True)

    # ---- final Linear ------------------------------------------------------
    # out_dim == 1 -> masked (TB,1) stores; negligible here (see review note).
    out = jnp.dot(h.astype(jnp.bfloat16), fw_ref[...],
                  preferred_element_type=jnp.float32) + fb_ref[...]
    out_ref[...] = out.astype(out_ref.dtype)


# ------------------------------ JAX wrapper --------------------------------- #
def bronet_critic_forward(state, action, params, *, batch_tile=None):
    batch, state_size = state.shape
    action_size = action.shape[-1]
    in_dim = state_size + action_size
    H = params["pln"].shape[-1]
    out_dim = params["fb"].shape[-1]
    num_layers = params["w1"].shape[0]

    # Pre-concatenate state/action once (tiny XLA op); single projection matmul.
    x = jnp.concatenate([state, action], axis=-1)

    if batch_tile is None:
        # Largest tile that keeps activations small while keeping nb >= 2 when
        # possible (feeds both TensorCores on v7x; harmless on v5e/v6e).
        cands = [t for t in (1024, 512, 256, 128, 64, 32, 16, 8)
                 if batch % t == 0 and t <= batch // 2]
        batch_tile = cands[0] if cands else batch
    assert batch % batch_tile == 0, "batch must be divisible by batch_tile"
    nb = batch // batch_tile

    # Resident-weight VMEM budget (bf16 weights + f32 LN slabs).
    resident_bytes = (in_dim * H * 2 + 8 * H * 4
                      + 2 * num_layers * H * H * 2 + num_layers * 8 * H * 4
                      + H * out_dim * 2 + out_dim * 4)
    assert resident_bytes < (40 << 20), (
        "resident weight stack too large for VMEM; see TODO(synk) streamed path")
    io_bytes = 2 * (batch_tile * in_dim * 4 + batch_tile * out_dim * 4)
    act_bytes = 4 * batch_tile * H * 4
    vmem_limit = min(max(2 * (resident_bytes + io_bytes + act_bytes) + (4 << 20),
                         32 << 20), 64 << 20)

    batch_map = lambda b: (b, 0)
    const2 = lambda b: (0, 0)
    const3 = lambda b: (0, 0, 0)

    in_specs = [
        pl.BlockSpec((batch_tile, in_dim), batch_map),   # x (streamed per tile)
        pl.BlockSpec((in_dim, H), const2),               # projection weight
        pl.BlockSpec((8, H), const2),                    # packed projection LN/bias
        pl.BlockSpec((num_layers, H, H), const3),        # w1 stack (resident)
        pl.BlockSpec((num_layers, H, H), const3),        # w2 stack (resident)
        pl.BlockSpec((num_layers, 8, H), const3),        # packed block LN/bias
        pl.BlockSpec((H, out_dim), const2),              # final weight
        pl.BlockSpec((1, out_dim), const2),              # final bias
    ]
    out_specs = pl.BlockSpec((batch_tile, out_dim), batch_map)

    args = (x, params["pw"], params["pln"], params["w1"], params["w2"],
            params["ln"], params["fw"], params["fb"])

    flops = 2 * batch * (in_dim * H + 2 * num_layers * H * H + H * out_dim)
    bytes_accessed = (sum(int(a.size) * a.dtype.itemsize for a in args)
                      + batch * out_dim * 4)

    return pl.pallas_call(
        bronet_critic_kernel,
        out_shape=jax.ShapeDtypeStruct((batch, out_dim), jnp.float32),
        grid_spec=pltpu.PrefetchScalarGridSpec(
            num_scalar_prefetch=0,
            grid=(nb,),
            in_specs=in_specs,
            out_specs=out_specs,
        ),
        compiler_params=pltpu.CompilerParams(
            dimension_semantics=("parallel",),
            vmem_limit_bytes=int(vmem_limit),
        ),
        cost_estimate=pl.CostEstimate(
            flops=flops,
            transcendentals=batch * (2 * num_layers + 1),
            bytes_accessed=bytes_accessed,
        ),
    )(*args)


# --------------------------- parameter creation ------------------------------ #
def init_params(key, state_size, action_size, output_size, hidden_size, bronet_layers):
    """Synthetic init mirroring BroNetCritic shapes.

    Linear weights: orthogonal (as in layer_init), stored [in, out], bf16.
    Biases / LayerNorm gamma,beta: f32 (zeros / ones, PyTorch defaults), packed
    into (8, H) / (L, 8, H) slabs: projection rows = [pb, pg, pbt, pad...],
    block rows = [b1, g1, bt1, b2, g2, bt2, pad, pad].
    """
    ortho = jax.nn.initializers.orthogonal()
    keys = jax.random.split(key, 2 + 2 * bronet_layers)
    in_dim = state_size + action_size
    H, L, O = hidden_size, bronet_layers, output_size

    def stack_w(base):
        return jnp.stack(
            [ortho(keys[base + 2 * i], (H, H), jnp.float32) for i in range(L)],
            axis=0)

    pln = jnp.zeros((8, H), jnp.float32).at[1].set(1.0)                 # pg = 1
    ln = jnp.zeros((L, 8, H), jnp.float32).at[:, 1].set(1.0).at[:, 4].set(1.0)

    return {
        "pw": ortho(keys[0], (in_dim, H), jnp.float32).astype(jnp.bfloat16),
        "pln": pln,
        "w1": stack_w(2).astype(jnp.bfloat16),
        "w2": stack_w(3).astype(jnp.bfloat16),
        "ln": ln,
        "fw": ortho(keys[1], (H, O), jnp.float32).astype(jnp.bfloat16),
        "fb": jnp.zeros((1, O), jnp.float32),
    }


# ---------------------------- pure-JAX reference ------------------------------ #
def reference_forward(state, action, params):
    x = jnp.concatenate([state, action], axis=-1).astype(jnp.float32)
    pln = params["pln"]
    h = x @ params["pw"].astype(jnp.float32) + pln[0]
    h = jnp.maximum(_layer_norm_ref(h, pln[1], pln[2]), 0.0)
    for i in range(params["w1"].shape[0]):
        ln = params["ln"][i]
        o = h @ params["w1"][i].astype(jnp.float32) + ln[0]
        o = jnp.maximum(_layer_norm_ref(o, ln[1], ln[2]), 0.0)
        o = o @ params["w2"][i].astype(jnp.float32) + ln[3]
        o = _layer_norm_ref(o, ln[4], ln[5])
        h = h + o
    return h @ params["fw"].astype(jnp.float32) + params["fb"]


if __name__ == "__main__":
    # Lane-dense shapes: hidden is a multiple of 128; batch=256 gives two
    # "parallel" batch tiles (both TensorCores busy on v7x).
    batch = 256
    state_size, action_size = 12, 4
    hidden_size = 128
    output_size = 1
    bronet_layers = 2

    key = jax.random.PRNGKey(0)
    k_state, k_action, k_params = jax.random.split(key, 3)

    state = jax.random.normal(k_state, (batch, state_size), jnp.float32)
    action = jax.random.normal(k_action, (batch, action_size), jnp.float32)
    params = init_params(k_params, state_size, action_size, output_size,
                         hidden_size, bronet_layers)

    out = bronet_critic_forward(state, action, params)
    out = jax.block_until_ready(out)

    ref = reference_forward(state, action, params)
    assert out.shape == (batch, output_size)
    max_err = float(jnp.max(jnp.abs(out - ref)))
    assert jnp.allclose(out, ref, atol=5e-2, rtol=5e-2), f"max abs err {max_err}"
    print("KERNEL_OK")
</pallas_src>

<mosaic_0001>
module attributes {stable_mosaic.version = 11 : i64} {
  func.func @bronet_critic_kernel(%arg0: i32, %arg1: memref<128x16xf32, #tpu.memory_space<vmem>>, %arg2: memref<16x128xbf16, #tpu.memory_space<vmem>>, %arg3: memref<8x128xf32, #tpu.memory_space<vmem>>, %arg4: memref<2x128x128xbf16, #tpu.memory_space<vmem>>, %arg5: memref<2x128x128xbf16, #tpu.memory_space<vmem>>, %arg6: memref<2x8x128xf32, #tpu.memory_space<vmem>>, %arg7: memref<128x1xbf16, #tpu.memory_space<vmem>>, %arg8: memref<1x1xf32, #tpu.memory_space<vmem>>, %arg9: memref<128x1xf32, #tpu.memory_space<vmem>>) attributes {dimension_semantics = [#tpu.dimension_semantics<parallel>], iteration_bounds = array<i64: 2>, scalar_prefetch = 0 : i64, scratch_operands = 0 : i64, tpu.core_type = #tpu.core_type<tc>, window_params = [{transform_indices = @transform_0, window_bounds = array<i64: 128, 16>}, {pipeline_mode = #tpu.pipeline_mode<synchronous>, transform_indices = @transform_1, window_bounds = array<i64: 16, 128>}, {pipeline_mode = #tpu.pipeline_mode<synchronous>, transform_indices = @transform_2, window_bounds = array<i64: 8, 128>}, {pipeline_mode = #tpu.pipeline_mode<synchronous>, transform_indices = @transform_3, window_bounds = array<i64: 2, 128, 128>}, {pipeline_mode = #tpu.pipeline_mode<synchronous>, transform_indices = @transform_4, window_bounds = array<i64: 2, 128, 128>}, {pipeline_mode = #tpu.pipeline_mode<synchronous>, transform_indices = @transform_5, window_bounds = array<i64: 2, 8, 128>}, {pipeline_mode = #tpu.pipeline_mode<synchronous>, transform_indices = @transform_6, window_bounds = array<i64: 128, 1>}, {pipeline_mode = #tpu.pipeline_mode<synchronous>, transform_indices = @transform_7, window_bounds = array<i64: 1, 1>}, {transform_indices = @transform_8, window_bounds = array<i64: 128, 1>}]} {
    %c0 = arith.constant 0 : index
    %c0_0 = arith.constant 0 : index
    %0 = vector.load %arg3[%c0, %c0_0] : memref<8x128xf32, #tpu.memory_space<vmem>>, vector<8x128xf32>
    %c0_1 = arith.constant 0 : index
    %c0_2 = arith.constant 0 : index
    %1 = vector.load %arg1[%c0_1, %c0_2] : memref<128x16xf32, #tpu.memory_space<vmem>>, vector<128x16xf32>
    %2 = arith.truncf %1 : vector<128x16xf32> to vector<128x16xbf16>
    %c0_3 = arith.constant 0 : index
    %c0_4 = arith.constant 0 : index
    %3 = vector.load %arg2[%c0_3, %c0_4] : memref<16x128xbf16, #tpu.memory_space<vmem>>, vector<16x128xbf16>
    %cst = arith.constant dense<0.000000e+00> : vector<128x128xf32>
    %4 = tpu.matmul %2, %3, %cst {dimension_numbers = #tpu.dot_dimension_numbers<[1], [0], [0], [1], [0, 0, 1, 1], [], []>} : vector<128x16xbf16>, vector<16x128xbf16>, vector<128x128xf32> -> vector<128x128xf32>
    %5 = vector.extract_strided_slice %0 {offsets = [0, 0], sizes = [1, 128], strides = [1, 1]} : vector<8x128xf32> to vector<1x128xf32>
    %6 = vector.broadcast %5 : vector<1x128xf32> to vector<128x128xf32>
    %7 = arith.addf %4, %6 : vector<128x128xf32>
    %8 = vector.extract_strided_slice %0 {offsets = [1, 0], sizes = [1, 128], strides = [1, 1]} : vector<8x128xf32> to vector<1x128xf32>
    %9 = vector.extract_strided_slice %0 {offsets = [2, 0], sizes = [1, 128], strides = [1, 1]} : vector<8x128xf32> to vector<1x128xf32>
    %cst_5 = arith.constant dense<0.000000e+00> : vector<128xf32>
    %10 = vector.multi_reduction <add>, %7, %cst_5 [1] : vector<128x128xf32> to vector<128xf32>
    %11 = vector.shape_cast %10 : vector<128xf32> to vector<128x1xf32>
    %12 = arith.mulf %7, %7 : vector<128x128xf32>
    %cst_6 = arith.constant dense<0.000000e+00> : vector<128xf32>
    %13 = vector.multi_reduction <add>, %12, %cst_6 [1] : vector<128x128xf32> to vector<128xf32>
    %14 = vector.shape_cast %13 : vector<128xf32> to vector<128x1xf32>
    %cst_7 = arith.constant 7.812500e-03 : f32
    %15 = vector.broadcast %cst_7 : f32 to vector<128x1xf32>
    %16 = arith.mulf %11, %15 : vector<128x1xf32>
    %cst_8 = arith.constant 7.812500e-03 : f32
    %17 = vector.broadcast %cst_8 : f32 to vector<128x1xf32>
    %18 = arith.mulf %14, %17 : vector<128x1xf32>
    %19 = arith.mulf %16, %16 : vector<128x1xf32>
    %20 = arith.subf %18, %19 : vector<128x1xf32>
    %cst_9 = arith.constant 9.99999974E-6 : f32
    %21 = vector.broadcast %cst_9 : f32 to vector<128x1xf32>
    %22 = arith.addf %20, %21 : vector<128x1xf32>
    %23 = math.rsqrt %22 : vector<128x1xf32>
    %24 = vector.broadcast %8 : vector<1x128xf32> to vector<128x128xf32>
    %25 = vector.broadcast %23 : vector<128x1xf32> to vector<128x128xf32>
    %26 = arith.mulf %24, %25 : vector<128x128xf32>
    %27 = vector.broadcast %16 : vector<128x1xf32> to vector<128x128xf32>
    %28 = arith.subf %7, %27 : vector<128x128xf32>
    %29 = arith.mulf %28, %26 : vector<128x128xf32>
    %30 = vector.broadcast %9 : vector<1x128xf32> to vector<128x128xf32>
    %31 = arith.addf %29, %30 : vector<128x128xf32>
    %cst_10 = arith.constant 0.000000e+00 : f32
    %32 = vector.broadcast %cst_10 : f32 to vector<128x128xf32>
    %33 = arith.maximumf %31, %32 : vector<128x128xf32>
    %c0_i32 = arith.constant 0 : i32
    %34 = arith.index_cast %c0_i32 : i32 to index
    %c0_11 = arith.constant 0 : index
    %c0_12 = arith.constant 0 : index
    %35 = vector.load %arg6[%34, %c0_11, %c0_12] : memref<2x8x128xf32, #tpu.memory_space<vmem>>, vector<1x8x128xf32>
    %36 = vector.shape_cast %35 : vector<1x8x128xf32> to vector<8x128xf32>
    %37 = arith.truncf %33 : vector<128x128xf32> to vector<128x128xbf16>
    %38 = arith.index_cast %c0_i32 : i32 to index
    %c0_13 = arith.constant 0 : index
    %c0_14 = arith.constant 0 : index
    %39 = vector.load %arg4[%38, %c0_13, %c0_14] : memref<2x128x128xbf16, #tpu.memory_space<vmem>>, vector<1x128x128xbf16>
    %40 = vector.shape_cast %39 : vector<1x128x128xbf16> to vector<128x128xbf16>
    %cst_15 = arith.constant dense<0.000000e+00> : vector<128x128xf32>
    %41 = tpu.matmul %37, %40, %cst_15 {dimension_numbers = #tpu.dot_dimension_numbers<[1], [0], [0], [1], [0, 0, 1, 1], [], []>} : vector<128x128xbf16>, vector<128x128xbf16>, vector<128x128xf32> -> vector<128x128xf32>
    %42 = vector.extract_strided_slice %36 {offsets = [0, 0], sizes = [1, 128], strides = [1, 1]} : vector<8x128xf32> to vector<1x128xf32>
    %43 = vector.broadcast %42 : vector<1x128xf32> to vector<128x128xf32>
    %44 = arith.addf %41, %43 : vector<128x128xf32>
    %45 = vector.extract_strided_slice %36 {offsets = [1, 0], sizes = [1, 128], strides = [1, 1]} : vector<8x128xf32> to vector<1x128xf32>
    %46 = vector.extract_strided_slice %36 {offsets = [2, 0], sizes = [1, 128], strides = [1, 1]} : vector<8x128xf32> to vector<1x128xf32>
    %cst_16 = arith.constant dense<0.000000e+00> : vector<128xf32>
    %47 = vector.multi_reduction <add>, %44, %cst_16 [1] : vector<128x128xf32> to vector<128xf32>
    %48 = vector.shape_cast %47 : vector<128xf32> to vector<128x1xf32>
    %49 = arith.mulf %44, %44 : vector<128x128xf32>
    %cst_17 = arith.constant dense<0.000000e+00> : vector<128xf32>
    %50 = vector.multi_reduction <add>, %49, %cst_17 [1] : vector<128x128xf32> to vector<128xf32>
    %51 = vector.shape_cast %50 : vector<128xf32> to vector<128x1xf32>
    %cst_18 = arith.constant 7.812500e-03 : f32
    %52 = vector.broadcast %cst_18 : f32 to vector<128x1xf32>
    %53 = arith.mulf %48, %52 : vector<128x1xf32>
    %cst_19 = arith.constant 7.812500e-03 : f32
    %54 = vector.broadcast %cst_19 : f32 to vector<128x1xf32>
    %55 = arith.mulf %51, %54 : vector<128x1xf32>
    %56 = arith.mulf %53, %53 : vector<128x1xf32>
    %57 = arith.subf %55, %56 : vector<128x1xf32>
    %cst_20 = arith.constant 9.99999974E-6 : f32
    %58 = vector.broadcast %cst_20 : f32 to vector<128x1xf32>
    %59 = arith.addf %57, %58 : vector<128x1xf32>
    %60 = math.rsqrt %59 : vector<128x1xf32>
    %61 = vector.broadcast %45 : vector<1x128xf32> to vector<128x128xf32>
    %62 = vector.broadcast %60 : vector<128x1xf32> to vector<128x128xf32>
    %63 = arith.mulf %61, %62 : vector<128x128xf32>
    %64 = vector.broadcast %53 : vector<128x1xf32> to vector<128x128xf32>
    %65 = arith.subf %44, %64 : vector<128x128xf32>
    %66 = arith.mulf %65, %63 : vector<128x128xf32>
    %67 = vector.broadcast %46 : vector<1x128xf32> to vector<128x128xf32>
    %68 = arith.addf %66, %67 : vector<128x128xf32>
    %cst_21 = arith.constant 0.000000e+00 : f32
    %69 = vector.broadcast %cst_21 : f32 to vector<128x128xf32>
    %70 = arith.maximumf %68, %69 : vector<128x128xf32>
    %71 = arith.truncf %70 : vector<128x128xf32> to vector<128x128xbf16>
    %72 = arith.index_cast %c0_i32 : i32 to index
    %c0_22 = arith.constant 0 : index
    %c0_23 = arith.constant 0 : index
    %73 = vector.load %arg5[%72, %c0_22, %c0_23] : memref<2x128x128xbf16, #tpu.memory_space<vmem>>, vector<1x128x128xbf16>
    %74 = vector.shape_cast %73 : vector<1x128x128xbf16> to vector<128x128xbf16>
    %cst_24 = arith.constant dense<0.000000e+00> : vector<128x128xf32>
    %75 = tpu.matmul %71, %74, %cst_24 {dimension_numbers = #tpu.dot_dimension_numbers<[1], [0], [0], [1], [0, 0, 1, 1], [], []>} : vector<128x128xbf16>, vector<128x128xbf16>, vector<128x128xf32> -> vector<128x128xf32>
    %76 = vector.extract_strided_slice %36 {offsets = [3, 0], sizes = [1, 128], strides = [1, 1]} : vector<8x128xf32> to vector<1x128xf32>
    %77 = vector.broadcast %76 : vector<1x128xf32> to vector<128x128xf32>
    %78 = arith.addf %75, %77 : vector<128x128xf32>
    %79 = vector.extract_strided_slice %36 {offsets = [4, 0], sizes = [1, 128], strides = [1, 1]} : vector<8x128xf32> to vector<1x128xf32>
    %80 = vector.extract_strided_slice %36 {offsets = [5, 0], sizes = [1, 128], strides = [1, 1]} : vector<8x128xf32> to vector<1x128xf32>
    %cst_25 = arith.constant dense<0.000000e+00> : vector<128xf32>
    %81 = vector.multi_reduction <add>, %78, %cst_25 [1] : vector<128x128xf32> to vector<128xf32>
    %82 = vector.shape_cast %81 : vector<128xf32> to vector<128x1xf32>
    %83 = arith.mulf %78, %78 : vector<128x128xf32>
    %cst_26 = arith.constant dense<0.000000e+00> : vector<128xf32>
    %84 = vector.multi_reduction <add>, %83, %cst_26 [1] : vector<128x128xf32> to vector<128xf32>
    %85 = vector.shape_cast %84 : vector<128xf32> to vector<128x1xf32>
    %cst_27 = arith.constant 7.812500e-03 : f32
    %86 = vector.broadcast %cst_27 : f32 to vector<128x1xf32>
    %87 = arith.mulf %82, %86 : vector<128x1xf32>
    %cst_28 = arith.constant 7.812500e-03 : f32
    %88 = vector.broadcast %cst_28 : f32 to vector<128x1xf32>
    %89 = arith.mulf %85, %88 : vector<128x1xf32>
    %90 = arith.mulf %87, %87 : vector<128x1xf32>
    %91 = arith.subf %89, %90 : vector<128x1xf32>
    %cst_29 = arith.constant 9.99999974E-6 : f32
    %92 = vector.broadcast %cst_29 : f32 to vector<128x1xf32>
    %93 = arith.addf %91, %92 : vector<128x1xf32>
    %94 = math.rsqrt %93 : vector<128x1xf32>
    %95 = vector.broadcast %79 : vector<1x128xf32> to vector<128x128xf32>
    %96 = vector.broadcast %94 : vector<128x1xf32> to vector<128x128xf32>
    %97 = arith.mulf %95, %96 : vector<128x128xf32>
    %98 = vector.broadcast %87 : vector<128x1xf32> to vector<128x128xf32>
    %99 = arith.subf %78, %98 : vector<128x128xf32>
    %100 = arith.mulf %99, %97 : vector<128x128xf32>
    %101 = vector.broadcast %80 : vector<1x128xf32> to vector<128x128xf32>
    %102 = arith.addf %100, %101 : vector<128x128xf32>
    %103 = arith.addf %33, %102 : vector<128x128xf32>
    %c1_i32 = arith.constant 1 : i32
    %104 = arith.index_cast %c1_i32 : i32 to index
    %c0_30 = arith.constant 0 : index
    %c0_31 = arith.constant 0 : index
    %105 = vector.load %arg6[%104, %c0_30, %c0_31] : memref<2x8x128xf32, #tpu.memory_space<vmem>>, vector<1x8x128xf32>
    %106 = vector.shape_cast %105 : vector<1x8x128xf32> to vector<8x128xf32>
    %107 = arith.truncf %103 : vector<128x128xf32> to vector<128x128xbf16>
    %108 = arith.index_cast %c1_i32 : i32 to index
    %c0_32 = arith.constant 0 : index
    %c0_33 = arith.constant 0 : index
    %109 = vector.load %arg4[%108, %c0_32, %c0_33] : memref<2x128x128xbf16, #tpu.memory_space<vmem>>, vector<1x128x128xbf16>
    %110 = vector.shape_cast %109 : vector<1x128x128xbf16> to vector<128x128xbf16>
    %cst_34 = arith.constant dense<0.000000e+00> : vector<128x128xf32>
    %111 = tpu.matmul %107, %110, %cst_34 {dimension_numbers = #tpu.dot_dimension_numbers<[1], [0], [0], [1], [0, 0, 1, 1], [], []>} : vector<128x128xbf16>, vector<128x128xbf16>, vector<128x128xf32> -> vector<128x128xf32>
    %112 = vector.extract_strided_slice %106 {offsets = [0, 0], sizes = [1, 128], strides = [1, 1]} : vector<8x128xf32> to vector<1x128xf32>
    %113 = vector.broadcast %112 : vector<1x128xf32> to vector<128x128xf32>
    %114 = arith.addf %111, %113 : vector<128x128xf32>
    %115 = vector.extract_strided_slice %106 {offsets = [1, 0], sizes = [1, 128], strides = [1, 1]} : vector<8x128xf32> to vector<1x128xf32>
    %116 = vector.extract_strided_slice %106 {offsets = [2, 0], sizes = [1, 128], strides = [1, 1]} : vector<8x128xf32> to vector<1x128xf32>
    %cst_35 = arith.constant dense<0.000000e+00> : vector<128xf32>
    %117 = vector.multi_reduction <add>, %114, %cst_35 [1] : vector<128x128xf32> to vector<128xf32>
    %118 = vector.shape_cast %117 : vector<128xf32> to vector<128x1xf32>
    %119 = arith.mulf %114, %114 : vector<128x128xf32>
    %cst_36 = arith.constant dense<0.000000e+00> : vector<128xf32>
    %120 = vector.multi_reduction <add>, %119, %cst_36 [1] : vector<128x128xf32> to vector<128xf32>
    %121 = vector.shape_cast %120 : vector<128xf32> to vector<128x1xf32>
    %cst_37 = arith.constant 7.812500e-03 : f32
    %122 = vector.broadcast %cst_37 : f32 to vector<128x1xf32>
    %123 = arith.mulf %118, %122 : vector<128x1xf32>
    %cst_38 = arith.constant 7.812500e-03 : f32
    %124 = vector.broadcast %cst_38 : f32 to vector<128x1xf32>
    %125 = arith.mulf %121, %124 : vector<128x1xf32>
    %126 = arith.mulf %123, %123 : vector<128x1xf32>
    %127 = arith.subf %125, %126 : vector<128x1xf32>
    %cst_39 = arith.constant 9.99999974E-6 : f32
    %128 = vector.broadcast %cst_39 : f32 to vector<128x1xf32>
    %129 = arith.addf %127, %128 : vector<128x1xf32>
    %130 = math.rsqrt %129 : vector<128x1xf32>
    %131 = vector.broadcast %115 : vector<1x128xf32> to vector<128x128xf32>
    %132 = vector.broadcast %130 : vector<128x1xf32> to vector<128x128xf32>
    %133 = arith.mulf %131, %132 : vector<128x128xf32>
    %134 = vector.broadcast %123 : vector<128x1xf32> to vector<128x128xf32>
    %135 = arith.subf %114, %134 : vector<128x128xf32>
    %136 = arith.mulf %135, %133 : vector<128x128xf32>
    %137 = vector.broadcast %116 : vector<1x128xf32> to vector<128x128xf32>
    %138 = arith.addf %136, %137 : vector<128x128xf32>
    %cst_40 = arith.constant 0.000000e+00 : f32
    %139 = vector.broadcast %cst_40 : f32 to vector<128x128xf32>
    %140 = arith.maximumf %138, %139 : vector<128x128xf32>
    %141 = arith.truncf %140 : vector<128x128xf32> to vector<128x128xbf16>
    %142 = arith.index_cast %c1_i32 : i32 to index
    %c0_41 = arith.constant 0 : index
    %c0_42 = arith.constant 0 : index
    %143 = vector.load %arg5[%142, %c0_41, %c0_42] : memref<2x128x128xbf16, #tpu.memory_space<vmem>>, vector<1x128x128xbf16>
    %144 = vector.shape_cast %143 : vector<1x128x128xbf16> to vector<128x128xbf16>
    %cst_43 = arith.constant dense<0.000000e+00> : vector<128x128xf32>
    %145 = tpu.matmul %141, %144, %cst_43 {dimension_numbers = #tpu.dot_dimension_numbers<[1], [0], [0], [1], [0, 0, 1, 1], [], []>} : vector<128x128xbf16>, vector<128x128xbf16>, vector<128x128xf32> -> vector<128x128xf32>
    %146 = vector.extract_strided_slice %106 {offsets = [3, 0], sizes = [1, 128], strides = [1, 1]} : vector<8x128xf32> to vector<1x128xf32>
    %147 = vector.broadcast %146 : vector<1x128xf32> to vector<128x128xf32>
    %148 = arith.addf %145, %147 : vector<128x128xf32>
    %149 = vector.extract_strided_slice %106 {offsets = [4, 0], sizes = [1, 128], strides = [1, 1]} : vector<8x128xf32> to vector<1x128xf32>
    %150 = vector.extract_strided_slice %106 {offsets = [5, 0], sizes = [1, 128], strides = [1, 1]} : vector<8x128xf32> to vector<1x128xf32>
    %cst_44 = arith.constant dense<0.000000e+00> : vector<128xf32>
    %151 = vector.multi_reduction <add>, %148, %cst_44 [1] : vector<128x128xf32> to vector<128xf32>
    %152 = vector.shape_cast %151 : vector<128xf32> to vector<128x1xf32>
    %153 = arith.mulf %148, %148 : vector<128x128xf32>
    %cst_45 = arith.constant dense<0.000000e+00> : vector<128xf32>
    %154 = vector.multi_reduction <add>, %153, %cst_45 [1] : vector<128x128xf32> to vector<128xf32>
    %155 = vector.shape_cast %154 : vector<128xf32> to vector<128x1xf32>
    %cst_46 = arith.constant 7.812500e-03 : f32
    %156 = vector.broadcast %cst_46 : f32 to vector<128x1xf32>
    %157 = arith.mulf %152, %156 : vector<128x1xf32>
    %cst_47 = arith.constant 7.812500e-03 : f32
    %158 = vector.broadcast %cst_47 : f32 to vector<128x1xf32>
    %159 = arith.mulf %155, %158 : vector<128x1xf32>
    %160 = arith.mulf %157, %157 : vector<128x1xf32>
    %161 = arith.subf %159, %160 : vector<128x1xf32>
    %cst_48 = arith.constant 9.99999974E-6 : f32
    %162 = vector.broadcast %cst_48 : f32 to vector<128x1xf32>
    %163 = arith.addf %161, %162 : vector<128x1xf32>
    %164 = math.rsqrt %163 : vector<128x1xf32>
    %165 = vector.broadcast %149 : vector<1x128xf32> to vector<128x128xf32>
    %166 = vector.broadcast %164 : vector<128x1xf32> to vector<128x128xf32>
    %167 = arith.mulf %165, %166 : vector<128x128xf32>
    %168 = vector.broadcast %157 : vector<128x1xf32> to vector<128x128xf32>
    %169 = arith.subf %148, %168 : vector<128x128xf32>
    %170 = arith.mulf %169, %167 : vector<128x128xf32>
    %171 = vector.broadcast %150 : vector<1x128xf32> to vector<128x128xf32>
    %172 = arith.addf %170, %171 : vector<128x128xf32>
    %173 = arith.addf %103, %172 : vector<128x128xf32>
    %c2_i32 = arith.constant 2 : i32
    %174 = arith.truncf %173 : vector<128x128xf32> to vector<128x128xbf16>
    %c0_49 = arith.constant 0 : index
    %c0_50 = arith.constant 0 : index
    %175 = vector.load %arg7[%c0_49, %c0_50] : memref<128x1xbf16, #tpu.memory_space<vmem>>, vector<128x1xbf16>
    %cst_51 = arith.constant dense<0.000000e+00> : vector<128x1xf32>
    %176 = tpu.matmul %174, %175, %cst_51 {dimension_numbers = #tpu.dot_dimension_numbers<[1], [0], [0], [1], [0, 0, 1, 1], [], []>} : vector<128x128xbf16>, vector<128x1xbf16>, vector<128x1xf32> -> vector<128x1xf32>
    %c0_52 = arith.constant 0 : index
    %c0_53 = arith.constant 0 : index
    %177 = vector.load %arg8[%c0_52, %c0_53] : memref<1x1xf32, #tpu.memory_space<vmem>>, vector<1x1xf32>
    %178 = vector.broadcast %177 : vector<1x1xf32> to vector<128x1xf32>
    %179 = arith.addf %176, %178 : vector<128x1xf32>
    %c0_54 = arith.constant 0 : index
    %c0_55 = arith.constant 0 : index
    %180 = vector.load %arg9[%c0_54, %c0_55] : memref<128x1xf32, #tpu.memory_space<vmem>>, vector<128x1xf32>
    tpu.vector_store %arg9[%c0_54, %c0_55], %179 {strides = array<i32>} : memref<128x1xf32, #tpu.memory_space<vmem>>, vector<128x1xf32>,
    return
  }
  func.func @transform_0(%arg0: i32) -> (i32, i32) {
    %c0_i32 = arith.constant 0 : i32
    %c0_i32_0 = arith.constant 0 : i32
    return %arg0, %c0_i32 : i32, i32
  }
  func.func @transform_1(%arg0: i32) -> (i32, i32) {
    %c0_i32 = arith.constant 0 : i32
    %c0_i32_0 = arith.constant 0 : i32
    %c0_i32_1 = arith.constant 0 : i32
    return %c0_i32, %c0_i32_0 : i32, i32
  }
  func.func @transform_2(%arg0: i32) -> (i32, i32) {
    %c0_i32 = arith.constant 0 : i32
    %c0_i32_0 = arith.constant 0 : i32
    %c0_i32_1 = arith.constant 0 : i32
    return %c0_i32, %c0_i32_0 : i32, i32
  }
  func.func @transform_3(%arg0: i32) -> (i32, i32, i32) {
    %c0_i32 = arith.constant 0 : i32
    %c0_i32_0 = arith.constant 0 : i32
    %c0_i32_1 = arith.constant 0 : i32
    %c0_i32_2 = arith.constant 0 : i32
    return %c0_i32, %c0_i32_0, %c0_i32_1 : i32, i32, i32
  }
  func.func @transform_4(%arg0: i32) -> (i32, i32, i32) {
    %c0_i32 = arith.constant 0 : i32
    %c0_i32_0 = arith.constant 0 : i32
    %c0_i32_1 = arith.constant 0 : i32
    %c0_i32_2 = arith.constant 0 : i32
    return %c0_i32, %c0_i32_0, %c0_i32_1 : i32, i32, i32
  }
  func.func @transform_5(%arg0: i32) -> (i32, i32, i32) {
    %c0_i32 = arith.constant 0 : i32
    %c0_i32_0 = arith.constant 0 : i32
    %c0_i32_1 = arith.constant 0 : i32
    %c0_i32_2 = arith.constant 0 : i32
    return %c0_i32, %c0_i32_0, %c0_i32_1 : i32, i32, i32
  }
  func.func @transform_6(%arg0: i32) -> (i32, i32) {
    %c0_i32 = arith.constant 0 : i32
    %c0_i32_0 = arith.constant 0 : i32
    %c0_i32_1 = arith.constant 0 : i32
    return %c0_i32, %c0_i32_0 : i32, i32
  }
  func.func @transform_7(%arg0: i32) -> (i32, i32) {
    %c0_i32 = arith.constant 0 : i32
    %c0_i32_0 = arith.constant 0 : i32
    %c0_i32_1 = arith.constant 0 : i32
    return %c0_i32, %c0_i32_0 : i32, i32
  }
  func.func @transform_8(%arg0: i32) -> (i32, i32) {
    %c0_i32 = arith.constant 0 : i32
    %c0_i32_0 = arith.constant 0 : i32
    return %arg0, %c0_i32 : i32, i32
  }
}

</mosaic_0001>

<llo_original>
// kernel: tpu_custom_call.1
$region0: #{tpu_custom_call.1}
  #allocation0 [shape = 'u32[]', space=smem, size = 0x4, offset = 0x4, fixed_abs, tag = 'smem constant byte address 0x4 - core index']
  #allocation1 [shape = 'u32[144,128]{1,0:T(1,128)}', space=vmem, size = 0x12000, scoped, tag = 'internal scratch']
  #allocation2 [shape = 'f32[1,1]{1,0:T(1,128)S(1)}', space=vmem, size = 0x200, scoped, tag = 'scoped memory for tpu_custom_call.1']
  %s0 = inlined_call_operand.vmem [shape: f32[256,16], index: 0, kind: input, shape index: {}]
  %s1 = inlined_call_operand.vmem [shape: bf16[16,128], index: 1, kind: input, shape index: {}]
  %s2 = inlined_call_operand.vmem [shape: f32[8,128], index: 2, kind: input, shape index: {}]
  %s3 = inlined_call_operand.vmem [shape: bf16[2,128,128], index: 3, kind: input, shape index: {}]
  %s4 = inlined_call_operand.vmem [shape: bf16[2,128,128], index: 4, kind: input, shape index: {}]
  %s5 = inlined_call_operand.vmem [shape: f32[2,8,128], index: 5, kind: input, shape index: {}]
  %s6 = inlined_call_operand.vmem [shape: bf16[128,1], index: 6, kind: input, shape index: {}]
  %s7 = inlined_call_operand.<no memory space> [shape: f32[1,1], index: 7, kind: input, shape index: {}]
  %s8 = inlined_call_operand.vmem [shape: f32[256,1], index: 8, kind: output, shape index: {}]
  %s9 = sld [smem:[#allocation0]]
  $region65: #{tpu_custom_call.1} parent=0
    _
  %s11 = ssub.s32 1, %s9
  %s12 = scalar_select 0, %s11, %s9
  %v13 = vstv %s7
  %14 = vst [vmem:[#allocation2] sm:$0x1] %v13
  loop: start=0, step=1, limit=4
  $region2: #{tpu_custom_call.1} parent=0 // loop_pre_header
    _
  $region3: #{tpu_custom_call.1} parent=0 // loop_header
    %s16 = sphi 0, %s20
    %p17 = scmp.ge.s32.totalorder %s16, 4
    %s26 = sphi 0, %s28
    %s29 = sphi 0, %s26
    %s30 = sphi 0, %s29
    %s46 = sphi 0, %s30
    %s50 = sphi 0, %s50
    %s52 = sphi 0, %s50
    %s53 = sphi 0, %s52
    %s67 = sphi 0, %s53
    %s71 = sphi 0, %s71
    %s73 = sphi 0, %s71
    %s74 = sphi 0, %s73
    %s88 = sphi 0, %s74
    %s92 = sphi 0, %s92
    %s94 = sphi 0, %s92
    %s95 = sphi 0, %s94
    %s109 = sphi 0, %s95
    %s113 = sphi 0, %s113
    %s115 = sphi 0, %s113
    %s116 = sphi 0, %s115
    %s130 = sphi 0, %s116
    %s134 = sphi 0, %s134
    %s136 = sphi 0, %s134
    %s137 = sphi 0, %s136
    %s151 = sphi 0, %s137
    %s155 = sphi 0, %s155
    %s157 = sphi 0, %s155
    %s158 = sphi 0, %s157
    %s172 = sphi 0, %s158
    %s176 = sphi 0, %s176
    %s178 = sphi 0, %s176
    %s179 = sphi 0, %s178
    %s193 = sphi 0, %s179
    %s199 = sphi 0, %s201
    %s202 = sphi 0, %s199
    %s203 = sphi 0, %s202
    %s219 = sphi 0, %s203
  $region4: #{tpu_custom_call.1} parent=0 // loop_header_branch
    %19 = sbr.rel (%p17) target = $region8
  $region5: #{tpu_custom_call.1} parent=0 // loop_body
    %s21 = ssub.s32 %s16, 1
    %s22 = ssub.s32 %s16, 2
    %s23 = sadd.s32 %s16, 1
    %s24 = ssub.s32 %s16, %s23
    %p25 = scmp.eq.s32.totalorder %s24, 0
    %s27 = sadd.s32 %s26, 1
    %s28 = scalar_select %p25, %s26, %s27
    %p31 = pneg %p25
    %p32 = scmp.eq.s32.totalorder %s16, 1
    %p33 = por %p31, %p32
    %p34 = scmp.ne.s32.totalorder %s26, %s29
    %p35 = scmp.eq.s32.totalorder %s16, 0
    %p36 = por %p34, %p35
    %p37 = scmp.ne.s32.totalorder %s26, %s29
    %p38 = scmp.eq.s32.totalorder %s21, 1
    %p39 = por %p37, %p38
    %p40 = scmp.ne.s32.totalorder %s29, %s30
    %p41 = scmp.eq.s32.totalorder %s21, 0
    %p42 = por %p40, %p41
    %p43 = scmp.ne.s32.totalorder %s29, %s30
    %p44 = scmp.eq.s32.totalorder %s22, 1
    %p45 = por %p43, %p44
    %p47 = scmp.ne.s32.totalorder %s30, %s46
    %p48 = scmp.eq.s32.totalorder %s22, 0
    %p49 = por %p47, %p48
    %s51 = sadd.s32 %s50, 1
    %p54 = scmp.eq.s32.totalorder %s16, 1
    %p55 = scmp.ne.s32.totalorder %s50, %s52
    %p56 = scmp.eq.s32.totalorder %s16, 0
    %p57 = por %p55, %p56
    %p58 = scmp.ne.s32.totalorder %s50, %s52
    %p59 = scmp.eq.s32.totalorder %s21, 1
    %p60 = por %p58, %p59
    %p61 = scmp.ne.s32.totalorder %s52, %s53
    %p62 = scmp.eq.s32.totalorder %s21, 0
    %p63 = por %p61, %p62
    %p64 = scmp.ne.s32.totalorder %s52, %s53
    %p65 = scmp.eq.s32.totalorder %s22, 1
    %p66 = por %p64, %p65
    %p68 = scmp.ne.s32.totalorder %s53, %s67
    %p69 = scmp.eq.s32.totalorder %s22, 0
    %p70 = por %p68, %p69
    %s72 = sadd.s32 %s71, 1
    %p75 = scmp.eq.s32.totalorder %s16, 1
    %p76 = scmp.ne.s32.totalorder %s71, %s73
    %p77 = scmp.eq.s32.totalorder %s16, 0
    %p78 = por %p76, %p77
    %p79 = scmp.ne.s32.totalorder %s71, %s73
    %p80 = scmp.eq.s32.totalorder %s21, 1
    %p81 = por %p79, %p80
    %p82 = scmp.ne.s32.totalorder %s73, %s74
    %p83 = scmp.eq.s32.totalorder %s21, 0
    %p84 = por %p82, %p83
    %p85 = scmp.ne.s32.totalorder %s73, %s74
    %p86 = scmp.eq.s32.totalorder %s22, 1
    %p87 = por %p85, %p86
    %p89 = scmp.ne.s32.totalorder %s74, %s88
    %p90 = scmp.eq.s32.totalorder %s22, 0
    %p91 = por %p89, %p90
    %s93 = sadd.s32 %s92, 1
    %p96 = scmp.eq.s32.totalorder %s16, 1
    %p97 = scmp.ne.s32.totalorder %s92, %s94
    %p98 = scmp.eq.s32.totalorder %s16, 0
    %p99 = por %p97, %p98
    %p100 = scmp.ne.s32.totalorder %s92, %s94
    %p101 = scmp.eq.s32.totalorder %s21, 1
    %p102 = por %p100, %p101
    %p103 = scmp.ne.s32.totalorder %s94, %s95
    %p104 = scmp.eq.s32.totalorder %s21, 0
    %p105 = por %p103, %p104
    %p106 = scmp.ne.s32.totalorder %s94, %s95
    %p107 = scmp.eq.s32.totalorder %s22, 1
    %p108 = por %p106, %p107
    %p110 = scmp.ne.s32.totalorder %s95, %s109
    %p111 = scmp.eq.s32.totalorder %s22, 0
    %p112 = por %p110, %p111
    %s114 = sadd.s32 %s113, 1
    %p117 = scmp.eq.s32.totalorder %s16, 1
    %p118 = scmp.ne.s32.totalorder %s113, %s115
    %p119 = scmp.eq.s32.totalorder %s16, 0
    %p120 = por %p118, %p119
    %p121 = scmp.ne.s32.totalorder %s113, %s115
    %p122 = scmp.eq.s32.totalorder %s21, 1
    %p123 = por %p121, %p122
    %p124 = scmp.ne.s32.totalorder %s115, %s116
    %p125 = scmp.eq.s32.totalorder %s21, 0
    %p126 = por %p124, %p125
    %p127 = scmp.ne.s32.totalorder %s115, %s116
    %p128 = scmp.eq.s32.totalorder %s22, 1
    %p129 = por %p127, %p128
    %p131 = scmp.ne.s32.totalorder %s116, %s130
    %p132 = scmp.eq.s32.totalorder %s22, 0
    %p133 = por %p131, %p132
    %s135 = sadd.s32 %s134, 1
    %p138 = scmp.eq.s32.totalorder %s16, 1
    %p139 = scmp.ne.s32.totalorder %s134, %s136
    %p140 = scmp.eq.s32.totalorder %s16, 0
    %p141 = por %p139, %p140
    %p142 = scmp.ne.s32.totalorder %s134, %s136
    %p143 = scmp.eq.s32.totalorder %s21, 1
    %p144 = por %p142, %p143
    %p145 = scmp.ne.s32.totalorder %s136, %s137
    %p146 = scmp.eq.s32.totalorder %s21, 0
    %p147 = por %p145, %p146
    %p148 = scmp.ne.s32.totalorder %s136, %s137
    %p149 = scmp.eq.s32.totalorder %s22, 1
    %p150 = por %p148, %p149
    %p152 = scmp.ne.s32.totalorder %s137, %s151
    %p153 = scmp.eq.s32.totalorder %s22, 0
    %p154 = por %p152, %p153
    %s156 = sadd.s32 %s155, 1
    %p159 = scmp.eq.s32.totalorder %s16, 1
    %p160 = scmp.ne.s32.totalorder %s155, %s157
    %p161 = scmp.eq.s32.totalorder %s16, 0
    %p162 = por %p160, %p161
    %p163 = scmp.ne.s32.totalorder %s155, %s157
    %p164 = scmp.eq.s32.totalorder %s21, 1
    %p165 = por %p163, %p164
    %p166 = scmp.ne.s32.totalorder %s157, %s158
    %p167 = scmp.eq.s32.totalorder %s21, 0
    %p168 = por %p166, %p167
    %p169 = scmp.ne.s32.totalorder %s157, %s158
    %p170 = scmp.eq.s32.totalorder %s22, 1
    %p171 = por %p169, %p170
    %p173 = scmp.ne.s32.totalorder %s158, %s172
    %p174 = scmp.eq.s32.totalorder %s22, 0
    %p175 = por %p173, %p174
    %s177 = sadd.s32 %s176, 1
    %p180 = scmp.eq.s32.totalorder %s16, 1
    %p181 = scmp.ne.s32.totalorder %s176, %s178
    %p182 = scmp.eq.s32.totalorder %s16, 0
    %p183 = por %p181, %p182
    %p184 = scmp.ne.s32.totalorder %s176, %s178
    %p185 = scmp.eq.s32.totalorder %s21, 1
    %p186 = por %p184, %p185
    %p187 = scmp.ne.s32.totalorder %s178, %s179
    %p188 = scmp.eq.s32.totalorder %s21, 0
    %p189 = por %p187, %p188
    %p190 = scmp.ne.s32.totalorder %s178, %s179
    %p191 = scmp.eq.s32.totalorder %s22, 1
    %p192 = por %p190, %p191
    %p194 = scmp.ne.s32.totalorder %s179, %s193
    %p195 = scmp.eq.s32.totalorder %s22, 0
    %p196 = por %p194, %p195
    %s197 = ssub.s32 %s16, %s23
    %p198 = scmp.eq.s32.totalorder %s197, 0
    %s200 = sadd.s32 %s199, 1
    %s201 = scalar_select %p198, %s199, %s200
    %p204 = pneg %p198
    %p205 = scmp.eq.s32.totalorder %s16, 1
    %p206 = por %p204, %p205
    %p207 = scmp.ne.s32.totalorder %s199, %s202
    %p208 = scmp.eq.s32.totalorder %s16, 0
    %p209 = por %p207, %p208
    %p210 = scmp.ne.s32.totalorder %s199, %s202
    %p211 = scmp.eq.s32.totalorder %s21, 1
    %p212 = por %p210, %p211
    %p213 = scmp.ne.s32.totalorder %s202, %s203
    %p214 = scmp.eq.s32.totalorder %s21, 0
    %p215 = por %p213, %p214
    %p216 = scmp.ne.s32.totalorder %s202, %s203
    %p217 = scmp.eq.s32.totalorder %s22, 1
    %p218 = por %p216, %p217
    %p220 = scmp.ne.s32.totalorder %s203, %s219
    %p221 = scmp.eq.s32.totalorder %s22, 0
    %p222 = por %p220, %p221
    %p223 = scmp.le.s32.totalorder 1, %s16
    %p224 = scmp.lt.s32.totalorder %s16, 3
    %p225 = pnand %p223, %p224
    %p226 = pneg %p225
    // Predicated region
    $region9: #{tpu_custom_call.1} parent=5 // pred_check
      _
    $region10: #{tpu_custom_call.1} parent=5 // pred_check_branch
      %228 = sbr.rel (%p225) target = $region12
    $region11: #{tpu_custom_call.1} parent=5 // pred_region
      %s229 = ssub.s32 %s16, 1
      // Predicated region
      $region13: #{tpu_custom_call.1} parent=11 // pred_check
        %p230 = pneg %p63
      $region14: #{tpu_custom_call.1} parent=11 // pred_check_branch
        %232 = sbr.rel (%p230) target = $region16
      $region15: #{tpu_custom_call.1} parent=11 // pred_region
        _
      $region16: #{tpu_custom_call.1} parent=11 // pred_fallthru
        _
      // Predicated region
      $region17: #{tpu_custom_call.1} parent=11 // pred_check
        %p233 = pneg %p84
      $region18: #{tpu_custom_call.1} parent=11 // pred_check_branch
        %235 = sbr.rel (%p233) target = $region20
      $region19: #{tpu_custom_call.1} parent=11 // pred_region
        _
      $region20: #{tpu_custom_call.1} parent=11 // pred_fallthru
        _
      // Predicated region
      $region21: #{tpu_custom_call.1} parent=11 // pred_check
        %p236 = pneg %p105
      $region22: #{tpu_custom_call.1} parent=11 // pred_check_branch
        %238 = sbr.rel (%p236) target = $region24
      $region23: #{tpu_custom_call.1} parent=11 // pred_region
        _
      $region24: #{tpu_custom_call.1} parent=11 // pred_fallthru
        _
      // Predicated region
      $region25: #{tpu_custom_call.1} parent=11 // pred_check
        %p239 = pneg %p126
      $region26: #{tpu_custom_call.1} parent=11 // pred_check_branch
        %241 = sbr.rel (%p239) target = $region28
      $region27: #{tpu_custom_call.1} parent=11 // pred_region
        _
      $region28: #{tpu_custom_call.1} parent=11 // pred_fallthru
        _
      // Predicated region
      $region29: #{tpu_custom_call.1} parent=11 // pred_check
        %p242 = pneg %p147
      $region30: #{tpu_custom_call.1} parent=11 // pred_check_branch
        %244 = sbr.rel (%p242) target = $region32
      $region31: #{tpu_custom_call.1} parent=11 // pred_region
        _
      $region32: #{tpu_custom_call.1} parent=11 // pred_fallthru
        _
      // Predicated region
      $region33: #{tpu_custom_call.1} parent=11 // pred_check
        %p245 = pneg %p168
      $region34: #{tpu_custom_call.1} parent=11 // pred_check_branch
        %247 = sbr.rel (%p245) target = $region36
      $region35: #{tpu_custom_call.1} parent=11 // pred_region
        _
      $region36: #{tpu_custom_call.1} parent=11 // pred_fallthru
        _
      // Predicated region
      $region37: #{tpu_custom_call.1} parent=11 // pred_check
        %p248 = pneg %p189
      $region38: #{tpu_custom_call.1} parent=11 // pred_check_branch
        %250 = sbr.rel (%p248) target = $region40
      $region39: #{tpu_custom_call.1} parent=11 // pred_region
        _
      $region40: #{tpu_custom_call.1} parent=11 // pred_fallthru
        _
    $region12: #{tpu_custom_call.1} parent=5 // pred_fallthru
      _
    %p251 = scmp.lt.s32.totalorder %s16, 2
    // Predicated region
    $region41: #{tpu_custom_call.1} parent=5 // pred_check
      %p252 = pneg %p251
    $region42: #{tpu_custom_call.1} parent=5 // pred_check_branch
      %254 = sbr.rel (%p252) target = $region44
    $region43: #{tpu_custom_call.1} parent=5 // pred_region
      // Predicated region
      $region45: #{tpu_custom_call.1} parent=43 // pred_check
        %p255 = pneg %p36
      $region46: #{tpu_custom_call.1} parent=43 // pred_check_branch
        %257 = sbr.rel (%p255) target = $region48
      $region47: #{tpu_custom_call.1} parent=43 // pred_region
        %s258 = smul.u32 16, %s16
        %p259 = scmp.lt.s32.totalorder %s258, 31
        %s260 = scalar_select %p259, %s258, 31
        %s261 = smul.addr %s260, 8
        %s262 = scalar_lea.vmem %s0, %s261
        %s263 = smul.u32 16, %s16
      $region48: #{tpu_custom_call.1} parent=43 // pred_fallthru
        _
    $region44: #{tpu_custom_call.1} parent=5 // pred_fallthru
      _
    %p264 = scmp.le.s32.totalorder 1, %s16
    %p265 = scmp.lt.s32.totalorder %s16, 3
    %p266 = pnand %p264, %p265
    %p267 = pneg %p266
    // Predicated region
    $region49: #{tpu_custom_call.1} parent=5 // pred_check
      _
    $region50: #{tpu_custom_call.1} parent=5 // pred_check_branch
      %269 = sbr.rel (%p266) target = $region52
    $region51: #{tpu_custom_call.1} parent=5 // pred_region
      %s270 = ssub.s32 %s16, 1
      %s271 = smul.u32 16, %s21
      %p272 = scmp.lt.s32.totalorder %s271, 31
      %s273 = scalar_select %p272, %s271, 31
      %s274 = smul.addr %s273, 8
      %s275 = scalar_lea.vmem %s0, %s274
      %p276 = pneg %p42
      %p277 = pneg %p39
      %p278 = pneg %p63
      %p279 = pneg %p60
      %p280 = pneg %p84
      %p281 = pneg %p81
      %p282 = pneg %p105
      %p283 = pneg %p102
      %p284 = pneg %p126
      %p285 = pneg %p123
      %p286 = pneg %p147
      %p287 = pneg %p144
      %p288 = pneg %p168
      %p289 = pneg %p165
      %p290 = pneg %p189
      %p291 = pneg %p186
      %p292 = pneg %p215
      %p293 = pneg %p212
      %s294 = smul.u32 16, %s21
      %p295 = scmp.lt.s32.totalorder %s294, 31
      %s296 = scalar_select %p295, %s294, 31
      %s297 = smul.addr %s296, 8
      %s298 = scalar_lea.vmem %s8, %s297
      %s299 = smul.u32 16, %s21
      %p300 = scmp.lt.s32.totalorder %s299, 31
      %s301 = scalar_select %p300, %s299, 31
      %s302 = smul.addr %s301, 8
      %s303 = scalar_lea.vmem %s0, %s302
      %s304 = smul.u32 16, %s21
      %s305 = smul.u32 16, %s21
      %p306 = scmp.lt.s32.totalorder %s305, 31
      %s307 = scalar_select %p306, %s305, 31
      %s308 = smul.addr %s307, 8
      %s309 = scalar_lea.vmem %s8, %s308
      %s310 = smul.u32 16, %s21
      %v312 = vld [vmem:[%s2] sm:$0xff]
      %v313 = vld [vmem:[%s303] sm:$0xff]
      %v314 = vld [vmem:[%s303 + $0x8] sm:$0xff]
      %v315 = vld [vmem:[%s303 + $0x10] sm:$0xff]
      %v316 = vld [vmem:[%s303 + $0x18] sm:$0xff]
      %v317 = vld [vmem:[%s303 + $0x20] sm:$0xff]
      %v318 = vld [vmem:[%s303 + $0x28] sm:$0xff]
      %v319 = vld [vmem:[%s303 + $0x30] sm:$0xff]
      %v320 = vld [vmem:[%s303 + $0x38] sm:$0xff]
      %v321 = vld [vmem:[%s303 + $0x40] sm:$0xff]
      %v322 = vld [vmem:[%s303 + $0x48] sm:$0xff]
      %v323 = vld [vmem:[%s303 + $0x50] sm:$0xff]
      %v324 = vld [vmem:[%s303 + $0x58] sm:$0xff]
      %v325 = vld [vmem:[%s303 + $0x60] sm:$0xff]
      %v326 = vld [vmem:[%s303 + $0x68] sm:$0xff]
      %v327 = vld [vmem:[%s303 + $0x70] sm:$0xff]
      %v328 = vld [vmem:[%s303 + $0x78] sm:$0xff]
      %v329 = vpack.c.bf16 %v314, %v313
      %v330 = vpack.c.bf16 %v316, %v315
      %v331 = vpack.c.bf16 %v318, %v317
      %v332 = vpack.c.bf16 %v320, %v319
      %v333 = vpack.c.bf16 %v322, %v321
      %v334 = vpack.c.bf16 %v324, %v323
      %v335 = vpack.c.bf16 %v326, %v325
      %v336 = vpack.c.bf16 %v328, %v327
      %v337 = vld [vmem:[%s1] sm:$0xf]
      %v338 = vld [vmem:[%s1 + $0x4] sm:$0xf]
      %v339 = vlaneseq
      %v340 = vshrl.u32 %v339, 7
      %v341 = vsub.s32 0, %v340
      %v342 = vrot.slane %v312, %v341
      %v345 = vunpack.c.l.b16 %v337
      %v346 = vunpack.c.l.b16 %v338
      %v347 = vpack.c.b16 %v346, %v345
      %vm349 = vcmask 130048
      %v351 = vsel %vm349, %v329, 0
      %v354 = vsel %vm349, %v330, 0
      %v357 = vsel %vm349, %v331, 0
      %v360 = vsel %vm349, %v332, 0
      %v363 = vsel %vm349, %v333, 0
      %v366 = vsel %vm349, %v334, 0
      %v369 = vsel %vm349, %v335, 0
      %v372 = vsel %vm349, %v336, 0
      %374 = vmatprep.subr.bf16.mxu0 0
      %375 = vmatpush1.bf16.msra.mxu0 %v347
      %376 = vmatprep.subr.bf16.mxu0 0
      %377 = vmatpush1.bf16.msra.mxu0 0
      %378 = vmatprep.subr.bf16.mxu0 0
      %379 = vmatpush1.bf16.msra.mxu0 0
      %380 = vmatprep.subr.bf16.mxu0 0
      %381 = vmatpush1.bf16.msra.mxu0 0
      %382 = vmatprep.subr.bf16.mxu0 0
      %383 = vmatpush1.bf16.msra.mxu0 0
      %384 = vmatprep.subr.bf16.mxu0 0
      %385 = vmatpush1.bf16.msra.mxu0 0
      %386 = vmatprep.subr.bf16.mxu0 0
      %387 = vmatpush1.bf16.msra.mxu0 0
      %388 = vmatprep.subr.bf16.mxu0 0
      %389 = vmatpush1.bf16.msra.mxu0 0
      %390 = vmatprep.subr.bf16.mxu0 0
      %391 = vmatpush1.bf16.msra.mxu0 0
      %392 = vmatprep.subr.bf16.mxu0 0
      %393 = vmatpush1.bf16.msra.mxu0 0
      %394 = vmatprep.subr.bf16.mxu0 0
      %395 = vmatpush1.bf16.msra.mxu0 0
      %396 = vmatprep.subr.bf16.mxu0 0
      %397 = vmatpush1.bf16.msra.mxu0 0
      %398 = vmatprep.subr.bf16.mxu0 0
      %399 = vmatpush1.bf16.msra.mxu0 0
      %400 = vmatprep.subr.bf16.mxu0 0
      %401 = vmatpush1.bf16.msra.mxu0 0
      %402 = vmatprep.subr.bf16.mxu0 0
      %403 = vmatpush1.bf16.msra.mxu0 0
      %404 = vmatprep.subr.bf16.mxu0 0
      %405 = vmatpush1.bf16.msra.mxu0 0
      %406 = vmatprep.mubr.bf16.mxu0 0
      %407 = vmatmul.mubr.bf16.gmra.mrb[0].mxu0 %v351
      %v408 = vpop.f32.mrb[0].mxu0
      %v409 = vadd.f32 %v342, %v408
      %v410 = vpop.f32.mrb[0].mxu0
      %v411 = vpop.f32.mrb[0].mxu0
      %v412 = vadd.f32 %v342, %v411
      %v413 = vpop.f32.mrb[0].mxu0
      %414 = vmatprep.mubr.bf16.mxu0 0
      %415 = vmatmul.mubr.bf16.gmra.mrb[0].mxu0 %v354
      %v416 = vpop.f32.mrb[0].mxu0
      %v417 = vadd.f32 %v342, %v416
      %v418 = vpop.f32.mrb[0].mxu0
      %v419 = vpop.f32.mrb[0].mxu0
      %v420 = vadd.f32 %v342, %v419
      %v421 = vpop.f32.mrb[0].mxu0
      %422 = vmatprep.mubr.bf16.mxu0 0
      %423 = vmatmul.mubr.bf16.gmra.mrb[0].mxu0 %v357
      %v424 = vpop.f32.mrb[0].mxu0
      %v425 = vadd.f32 %v342, %v424
      %v426 = vpop.f32.mrb[0].mxu0
      %v427 = vpop.f32.mrb[0].mxu0
      %v428 = vadd.f32 %v342, %v427
      %v429 = vpop.f32.mrb[0].mxu0
      %430 = vmatprep.mubr.bf16.mxu0 0
      %431 = vmatmul.mubr.bf16.gmra.mrb[0].mxu0 %v360
      %v432 = vpop.f32.mrb[0].mxu0
      %v433 = vadd.f32 %v342, %v432
      %v434 = vpop.f32.mrb[0].mxu0
      %v435 = vpop.f32.mrb[0].mxu0
      %v436 = vadd.f32 %v342, %v435
      %v437 = vpop.f32.mrb[0].mxu0
      %438 = vmatprep.mubr.bf16.mxu0 0
      %439 = vmatmul.mubr.bf16.gmra.mrb[0].mxu0 %v363
      %v440 = vpop.f32.mrb[0].mxu0
      %v441 = vadd.f32 %v342, %v440
      %v442 = vpop.f32.mrb[0].mxu0
      %v443 = vpop.f32.mrb[0].mxu0
      %v444 = vadd.f32 %v342, %v443
      %v445 = vpop.f32.mrb[0].mxu0
      %446 = vmatprep.mubr.bf16.mxu0 0
      %447 = vmatmul.mubr.bf16.gmra.mrb[0].mxu0 %v366
      %v448 = vpop.f32.mrb[0].mxu0
      %v449 = vadd.f32 %v342, %v448
      %v450 = vpop.f32.mrb[0].mxu0
      %v451 = vpop.f32.mrb[0].mxu0
      %v452 = vadd.f32 %v342, %v451
      %v453 = vpop.f32.mrb[0].mxu0
      %454 = vmatprep.mubr.bf16.mxu0 0
      %455 = vmatmul.mubr.bf16.gmra.mrb[0].mxu0 %v369
      %v456 = vpop.f32.mrb[0].mxu0
      %v457 = vadd.f32 %v342, %v456
      %v458 = vpop.f32.mrb[0].mxu0
      %v459 = vpop.f32.mrb[0].mxu0
      %v460 = vadd.f32 %v342, %v459
      %v461 = vpop.f32.mrb[0].mxu0
      %462 = vmatprep.mubr.bf16.mxu0 0
      %463 = vmatmul.mubr.bf16.gmra.mrb[0].mxu0 %v372
      %v464 = vpop.f32.mrb[0].mxu0
      %v465 = vadd.f32 %v342, %v464
      %v466 = vpop.f32.mrb[0].mxu0
      %v467 = vpop.f32.mrb[0].mxu0
      %v468 = vadd.f32 %v342, %v467
      %v469 = vpop.f32.mrb[0].mxu0
      %470 = vdwg.mxu0
      %471 = vadd.xlane.f32.xlu0 %v409
      %v472 = vpop.xlane.xlu0 %471
      %473 = vadd.xlane.f32.xlu0 %v412
      %v474 = vpop.xlane.xlu0 %473
      %475 = vadd.xlane.f32.xlu0 %v417
      %v476 = vpop.xlane.xlu0 %475
      %477 = vadd.xlane.f32.xlu0 %v420
      %v478 = vpop.xlane.xlu0 %477
      %479 = vadd.xlane.f32.xlu0 %v425
      %v480 = vpop.xlane.xlu0 %479
      %481 = vadd.xlane.f32.xlu0 %v428
      %v482 = vpop.xlane.xlu0 %481
      %483 = vadd.xlane.f32.xlu0 %v433
      %v484 = vpop.xlane.xlu0 %483
      %485 = vadd.xlane.f32.xlu0 %v436
      %v486 = vpop.xlane.xlu0 %485
      %487 = vadd.xlane.f32.xlu0 %v441
      %v488 = vpop.xlane.xlu0 %487
      %489 = vadd.xlane.f32.xlu0 %v444
      %v490 = vpop.xlane.xlu0 %489
      %491 = vadd.xlane.f32.xlu0 %v449
      %v492 = vpop.xlane.xlu0 %491
      %493 = vadd.xlane.f32.xlu0 %v452
      %v494 = vpop.xlane.xlu0 %493
      %495 = vadd.xlane.f32.xlu0 %v457
      %v496 = vpop.xlane.xlu0 %495
      %497 = vadd.xlane.f32.xlu0 %v460
      %v498 = vpop.xlane.xlu0 %497
      %499 = vadd.xlane.f32.xlu0 %v465
      %v500 = vpop.xlane.xlu0 %499
      %501 = vadd.xlane.f32.xlu0 %v468
      %v502 = vpop.xlane.xlu0 %501
      %v503 = vmul.f32 %v409, %v409
      %v504 = vmul.f32 %v412, %v412
      %v505 = vmul.f32 %v417, %v417
      %v506 = vmul.f32 %v420, %v420
      %v507 = vmul.f32 %v425, %v425
      %v508 = vmul.f32 %v428, %v428
      %v509 = vmul.f32 %v433, %v433
      %v510 = vmul.f32 %v436, %v436
      %v511 = vmul.f32 %v441, %v441
      %v512 = vmul.f32 %v444, %v444
      %v513 = vmul.f32 %v449, %v449
      %v514 = vmul.f32 %v452, %v452
      %v515 = vmul.f32 %v457, %v457
      %v516 = vmul.f32 %v460, %v460
      %v517 = vmul.f32 %v465, %v465
      %v518 = vmul.f32 %v468, %v468
      %519 = vadd.xlane.f32.xlu0 %v503
      %v520 = vpop.xlane.xlu0 %519
      %521 = vadd.xlane.f32.xlu0 %v504
      %v522 = vpop.xlane.xlu0 %521
      %523 = vadd.xlane.f32.xlu0 %v505
      %v524 = vpop.xlane.xlu0 %523
      %525 = vadd.xlane.f32.xlu0 %v506
      %v526 = vpop.xlane.xlu0 %525
      %527 = vadd.xlane.f32.xlu0 %v507
      %v528 = vpop.xlane.xlu0 %527
      %529 = vadd.xlane.f32.xlu0 %v508
      %v530 = vpop.xlane.xlu0 %529
      %531 = vadd.xlane.f32.xlu0 %v509
      %v532 = vpop.xlane.xlu0 %531
      %533 = vadd.xlane.f32.xlu0 %v510
      %v534 = vpop.xlane.xlu0 %533
      %535 = vadd.xlane.f32.xlu0 %v511
      %v536 = vpop.xlane.xlu0 %535
      %537 = vadd.xlane.f32.xlu0 %v512
      %v538 = vpop.xlane.xlu0 %537
      %539 = vadd.xlane.f32.xlu0 %v513
      %v540 = vpop.xlane.xlu0 %539
      %541 = vadd.xlane.f32.xlu0 %v514
      %v542 = vpop.xlane.xlu0 %541
      %543 = vadd.xlane.f32.xlu0 %v515
      %v544 = vpop.xlane.xlu0 %543
      %545 = vadd.xlane.f32.xlu0 %v516
      %v546 = vpop.xlane.xlu0 %545
      %547 = vadd.xlane.f32.xlu0 %v517
      %v548 = vpop.xlane.xlu0 %547
      %549 = vadd.xlane.f32.xlu0 %v518
      %v550 = vpop.xlane.xlu0 %549
      %v551 = vmul.f32 %v472, 0.0078125
      %v552 = vmul.f32 %v474, 0.0078125
      %v553 = vmul.f32 %v476, 0.0078125
      %v554 = vmul.f32 %v478, 0.0078125
      %v555 = vmul.f32 %v480, 0.0078125
      %v556 = vmul.f32 %v482, 0.0078125
      %v557 = vmul.f32 %v484, 0.0078125
      %v558 = vmul.f32 %v486, 0.0078125
      %v559 = vmul.f32 %v488, 0.0078125
      %v560 = vmul.f32 %v490, 0.0078125
      %v561 = vmul.f32 %v492, 0.0078125
      %v562 = vmul.f32 %v494, 0.0078125
      %v563 = vmul.f32 %v496, 0.0078125
      %v564 = vmul.f32 %v498, 0.0078125
      %v565 = vmul.f32 %v500, 0.0078125
      %v566 = vmul.f32 %v502, 0.0078125
      %v567 = vmul.f32 %v520, 0.0078125
      %v568 = vmul.f32 %v522, 0.0078125
      %v569 = vmul.f32 %v524, 0.0078125
      %v570 = vmul.f32 %v526, 0.0078125
      %v571 = vmul.f32 %v528, 0.0078125
      %v572 = vmul.f32 %v530, 0.0078125
      %v573 = vmul.f32 %v532, 0.0078125
      %v574 = vmul.f32 %v534, 0.0078125
      %v575 = vmul.f32 %v536, 0.0078125
      %v576 = vmul.f32 %v538, 0.0078125
      %v577 = vmul.f32 %v540, 0.0078125
      %v578 = vmul.f32 %v542, 0.0078125
      %v579 = vmul.f32 %v544, 0.0078125
      %v580 = vmul.f32 %v546, 0.0078125
      %v581 = vmul.f32 %v548, 0.0078125
      %v582 = vmul.f32 %v550, 0.0078125
      %v583 = vmul.f32 %v551, %v551
      %v584 = vmul.f32 %v552, %v552
      %v585 = vmul.f32 %v553, %v553
      %v586 = vmul.f32 %v554, %v554
      %v587 = vmul.f32 %v555, %v555
      %v588 = vmul.f32 %v556, %v556
      %v589 = vmul.f32 %v557, %v557
      %v590 = vmul.f32 %v558, %v558
      %v591 = vmul.f32 %v559, %v559
      %v592 = vmul.f32 %v560, %v560
      %v593 = vmul.f32 %v561, %v561
      %v594 = vmul.f32 %v562, %v562
      %v595 = vmul.f32 %v563, %v563
      %v596 = vmul.f32 %v564, %v564
      %v597 = vmul.f32 %v565, %v565
      %v598 = vmul.f32 %v566, %v566
      %v599 = vsub.f32 %v567, %v583
      %v600 = vsub.f32 %v568, %v584
      %v601 = vsub.f32 %v569, %v585
      %v602 = vsub.f32 %v570, %v586
      %v603 = vsub.f32 %v571, %v587
      %v604 = vsub.f32 %v572, %v588
      %v605 = vsub.f32 %v573, %v589
      %v606 = vsub.f32 %v574, %v590
      %v607 = vsub.f32 %v575, %v591
      %v608 = vsub.f32 %v576, %v592
      %v609 = vsub.f32 %v577, %v593
      %v610 = vsub.f32 %v578, %v594
      %v611 = vsub.f32 %v579, %v595
      %v612 = vsub.f32 %v580, %v596
      %v613 = vsub.f32 %v581, %v597
      %v614 = vsub.f32 %v582, %v598
      %v615 = vadd.f32 %v599, 1e-05
      %v616 = vadd.f32 %v600, 1e-05
      %v617 = vadd.f32 %v601, 1e-05
      %v618 = vadd.f32 %v602, 1e-05
      %v619 = vadd.f32 %v603, 1e-05
      %v620 = vadd.f32 %v604, 1e-05
      %v621 = vadd.f32 %v605, 1e-05
      %v622 = vadd.f32 %v606, 1e-05
      %v623 = vadd.f32 %v607, 1e-05
      %v624 = vadd.f32 %v608, 1e-05
      %v625 = vadd.f32 %v609, 1e-05
      %v626 = vadd.f32 %v610, 1e-05
      %v627 = vadd.f32 %v611, 1e-05
      %v628 = vadd.f32 %v612, 1e-05
      %v629 = vadd.f32 %v613, 1e-05
      %v630 = vadd.f32 %v614, 1e-05
      %v631 = vrsqrt.pop %v615
      %v632 = vrsqrt.pop %v616
      %v633 = vrsqrt.pop %v617
      %v634 = vrsqrt.pop %v618
      %v635 = vrsqrt.pop %v619
      %v636 = vrsqrt.pop %v620
      %v637 = vrsqrt.pop %v621
      %v638 = vrsqrt.pop %v622
      %v639 = vrsqrt.pop %v623
      %v640 = vrsqrt.pop %v624
      %v641 = vrsqrt.pop %v625
      %v642 = vrsqrt.pop %v626
      %v643 = vrsqrt.pop %v627
      %v644 = vrsqrt.pop %v628
      %v645 = vrsqrt.pop %v629
      %v646 = vrsqrt.pop %v630
      %v647 = vlaneseq
      %v648 = vshrl.u32 %v647, 7
      %v649 = vsub.s32 1, %v648
      %v650 = vrot.slane %v312, %v649
      %v651 = vmul.f32 %v650, %v631
      %v652 = vmul.f32 %v650, %v632
      %v653 = vmul.f32 %v650, %v633
      %v654 = vmul.f32 %v650, %v634
      %v655 = vmul.f32 %v650, %v635
      %v656 = vmul.f32 %v650, %v636
      %v657 = vmul.f32 %v650, %v637
      %v658 = vmul.f32 %v650, %v638
      %v659 = vmul.f32 %v650, %v639
      %v660 = vmul.f32 %v650, %v640
      %v661 = vmul.f32 %v650, %v641
      %v662 = vmul.f32 %v650, %v642
      %v663 = vmul.f32 %v650, %v643
      %v664 = vmul.f32 %v650, %v644
      %v665 = vmul.f32 %v650, %v645
      %v666 = vmul.f32 %v650, %v646
      %v667 = vsub.f32 %v409, %v551
      %v668 = vsub.f32 %v412, %v552
      %v669 = vsub.f32 %v417, %v553
      %v670 = vsub.f32 %v420, %v554
      %v671 = vsub.f32 %v425, %v555
      %v672 = vsub.f32 %v428, %v556
      %v673 = vsub.f32 %v433, %v557
      %v674 = vsub.f32 %v436, %v558
      %v675 = vsub.f32 %v441, %v559
      %v676 = vsub.f32 %v444, %v560
      %v677 = vsub.f32 %v449, %v561
      %v678 = vsub.f32 %v452, %v562
      %v679 = vsub.f32 %v457, %v563
      %v680 = vsub.f32 %v460, %v564
      %v681 = vsub.f32 %v465, %v565
      %v682 = vsub.f32 %v468, %v566
      %v683 = vmul.f32 %v667, %v651
      %v684 = vmul.f32 %v668, %v652
      %v685 = vmul.f32 %v669, %v653
      %v686 = vmul.f32 %v670, %v654
      %v687 = vmul.f32 %v671, %v655
      %v688 = vmul.f32 %v672, %v656
      %v689 = vmul.f32 %v673, %v657
      %v690 = vmul.f32 %v674, %v658
      %v691 = vmul.f32 %v675, %v659
      %v692 = vmul.f32 %v676, %v660
      %v693 = vmul.f32 %v677, %v661
      %v694 = vmul.f32 %v678, %v662
      %v695 = vmul.f32 %v679, %v663
      %v696 = vmul.f32 %v680, %v664
      %v697 = vmul.f32 %v681, %v665
      %v698 = vmul.f32 %v682, %v666
      %v699 = vlaneseq
      %v700 = vshrl.u32 %v699, 7
      %v701 = vsub.s32 2, %v700
      %v702 = vrot.slane %v312, %v701
      %v703 = vadd.f32 %v683, %v702
      %v704 = vadd.f32 %v684, %v702
      %v705 = vadd.f32 %v685, %v702
      %v706 = vadd.f32 %v686, %v702
      %v707 = vadd.f32 %v687, %v702
      %v708 = vadd.f32 %v688, %v702
      %v709 = vadd.f32 %v689, %v702
      %v710 = vadd.f32 %v690, %v702
      %v711 = vadd.f32 %v691, %v702
      %v712 = vadd.f32 %v692, %v702
      %v713 = vadd.f32 %v693, %v702
      %v714 = vadd.f32 %v694, %v702
      %v715 = vadd.f32 %v695, %v702
      %v716 = vadd.f32 %v696, %v702
      %v717 = vadd.f32 %v697, %v702
      %v718 = vadd.f32 %v698, %v702
      %v719 = vmax.f32 %v703, 0.0
      %v720 = vmax.f32 %v704, 0.0
      %v721 = vmax.f32 %v705, 0.0
      %v722 = vmax.f32 %v706, 0.0
      %v723 = vmax.f32 %v707, 0.0
      %v724 = vmax.f32 %v708, 0.0
      %v725 = vmax.f32 %v709, 0.0
      %v726 = vmax.f32 %v710, 0.0
      %v727 = vmax.f32 %v711, 0.0
      %v728 = vmax.f32 %v712, 0.0
      %v729 = vmax.f32 %v713, 0.0
      %v730 = vmax.f32 %v714, 0.0
      %v731 = vmax.f32 %v715, 0.0
      %v732 = vmax.f32 %v716, 0.0
      %v733 = vmax.f32 %v717, 0.0
      %v734 = vmax.f32 %v718, 0.0
      %v735 = vld [vmem:[%s5] sm:$0xff]
      %v736 = vpack.c.bf16 %v720, %v719
      %v737 = vpack.c.bf16 %v722, %v721
      %v738 = vpack.c.bf16 %v724, %v723
      %v739 = vpack.c.bf16 %v726, %v725
      %v740 = vpack.c.bf16 %v728, %v727
      %v741 = vpack.c.bf16 %v730, %v729
      %v742 = vpack.c.bf16 %v732, %v731
      %v743 = vpack.c.bf16 %v734, %v733
      %v744 = vld [vmem:[%s3] sm:$0xf]
      %v745 = vld [vmem:[%s3 + $0x4] sm:$0xf]
      %v746 = vld [vmem:[%s3 + $0x8] sm:$0xf]
      %v747 = vld [vmem:[%s3 + $0xc] sm:$0xf]
      %v748 = vld [vmem:[%s3 + $0x10] sm:$0xf]
      %v749 = vld [vmem:[%s3 + $0x14] sm:$0xf]
      %v750 = vld [vmem:[%s3 + $0x18] sm:$0xf]
      %v751 = vld [vmem:[%s3 + $0x1c] sm:$0xf]
      %v752 = vld [vmem:[%s3 + $0x20] sm:$0xf]
      %v753 = vld [vmem:[%s3 + $0x24] sm:$0xf]
      %v754 = vld [vmem:[%s3 + $0x28] sm:$0xf]
      %v755 = vld [vmem:[%s3 + $0x2c] sm:$0xf]
      %v756 = vld [vmem:[%s3 + $0x30] sm:$0xf]
      %v757 = vld [vmem:[%s3 + $0x34] sm:$0xf]
      %v758 = vld [vmem:[%s3 + $0x38] sm:$0xf]
      %v759 = vld [vmem:[%s3 + $0x3c] sm:$0xf]
      %v760 = vlaneseq
      %v761 = vshrl.u32 %v760, 7
      %v762 = vsub.s32 0, %v761
      %v763 = vrot.slane %v735, %v762
      %v780 = vunpack.c.l.b16 %v744
      %v781 = vunpack.c.l.b16 %v745
      %v782 = vunpack.c.l.b16 %v746
      %v783 = vunpack.c.l.b16 %v747
      %v784 = vunpack.c.l.b16 %v748
      %v785 = vunpack.c.l.b16 %v749
      %v786 = vunpack.c.l.b16 %v750
      %v787 = vunpack.c.l.b16 %v751
      %v788 = vunpack.c.l.b16 %v752
      %v789 = vunpack.c.l.b16 %v753
      %v790 = vunpack.c.l.b16 %v754
      %v791 = vunpack.c.l.b16 %v755
      %v792 = vunpack.c.l.b16 %v756
      %v793 = vunpack.c.l.b16 %v757
      %v794 = vunpack.c.l.b16 %v758
      %v795 = vunpack.c.l.b16 %v759
      %v796 = vpack.c.b16 %v781, %v780
      %v797 = vpack.c.b16 %v783, %v782
      %v798 = vpack.c.b16 %v785, %v784
      %v799 = vpack.c.b16 %v787, %v786
      %v800 = vpack.c.b16 %v789, %v788
      %v801 = vpack.c.b16 %v791, %v790
      %v802 = vpack.c.b16 %v793, %v792
      %v803 = vpack.c.b16 %v795, %v794
      %812 = vmatprep.subr.bf16.mxu0 0
      %813 = vmatpush1.bf16.msra.mxu0 %v796
      %814 = vmatprep.subr.bf16.mxu0 0
      %815 = vmatpush1.bf16.msra.mxu0 %v797
      %816 = vmatprep.subr.bf16.mxu0 0
      %817 = vmatpush1.bf16.msra.mxu0 %v798
      %818 = vmatprep.subr.bf16.mxu0 0
      %819 = vmatpush1.bf16.msra.mxu0 %v799
      %820 = vmatprep.subr.bf16.mxu0 0
      %821 = vmatpush1.bf16.msra.mxu0 %v800
      %822 = vmatprep.subr.bf16.mxu0 0
      %823 = vmatpush1.bf16.msra.mxu0 %v801
      %824 = vmatprep.subr.bf16.mxu0 0
      %825 = vmatpush1.bf16.msra.mxu0 %v802
      %826 = vmatprep.subr.bf16.mxu0 0
      %827 = vmatpush1.bf16.msra.mxu0 %v803
      %828 = vmatprep.subr.bf16.mxu0 0
      %829 = vmatpush1.bf16.msra.mxu0 0
      %830 = vmatprep.subr.bf16.mxu0 0
      %831 = vmatpush1.bf16.msra.mxu0 0
      %832 = vmatprep.subr.bf16.mxu0 0
      %833 = vmatpush1.bf16.msra.mxu0 0
      %834 = vmatprep.subr.bf16.mxu0 0
      %835 = vmatpush1.bf16.msra.mxu0 0
      %836 = vmatprep.subr.bf16.mxu0 0
      %837 = vmatpush1.bf16.msra.mxu0 0
      %838 = vmatprep.subr.bf16.mxu0 0
      %839 = vmatpush1.bf16.msra.mxu0 0
      %840 = vmatprep.subr.bf16.mxu0 0
      %841 = vmatpush1.bf16.msra.mxu0 0
      %842 = vmatprep.subr.bf16.mxu0 0
      %843 = vmatpush1.bf16.msra.mxu0 0
      %844 = vmatprep.mubr.bf16.mxu0 0
      %845 = vmatmul.mubr.bf16.gmra.mrb[0].mxu0 %v736
      %v846 = vpop.f32.mrb[0].mxu0
      %v847 = vadd.f32 %v763, %v846
      %v848 = vpop.f32.mrb[0].mxu0
      %v849 = vpop.f32.mrb[0].mxu0
      %v850 = vadd.f32 %v763, %v849
      %v851 = vpop.f32.mrb[0].mxu0
      %852 = vmatprep.mubr.bf16.mxu0 0
      %853 = vmatmul.mubr.bf16.gmra.mrb[0].mxu0 %v737
      %v854 = vpop.f32.mrb[0].mxu0
      %v855 = vadd.f32 %v763, %v854
      %v856 = vpop.f32.mrb[0].mxu0
      %v857 = vpop.f32.mrb[0].mxu0
      %v858 = vadd.f32 %v763, %v857
      %v859 = vpop.f32.mrb[0].mxu0
      %860 = vmatprep.mubr.bf16.mxu0 0
      %861 = vmatmul.mubr.bf16.gmra.mrb[0].mxu0 %v738
      %v862 = vpop.f32.mrb[0].mxu0
      %v863 = vadd.f32 %v763, %v862
      %v864 = vpop.f32.mrb[0].mxu0
      %v865 = vpop.f32.mrb[0].mxu0
      %v866 = vadd.f32 %v763, %v865
      %v867 = vpop.f32.mrb[0].mxu0
      %868 = vmatprep.mubr.bf16.mxu0 0
      %869 = vmatmul.mubr.bf16.gmra.mrb[0].mxu0 %v739
      %v870 = vpop.f32.mrb[0].mxu0
      %v871 = vadd.f32 %v763, %v870
      %v872 = vpop.f32.mrb[0].mxu0
      %v873 = vpop.f32.mrb[0].mxu0
      %v874 = vadd.f32 %v763, %v873
      %v875 = vpop.f32.mrb[0].mxu0
      %876 = vmatprep.mubr.bf16.mxu0 0
      %877 = vmatmul.mubr.bf16.gmra.mrb[0].mxu0 %v740
      %v878 = vpop.f32.mrb[0].mxu0
      %v879 = vadd.f32 %v763, %v878
      %v880 = vpop.f32.mrb[0].mxu0
      %v881 = vpop.f32.mrb[0].mxu0
      %v882 = vadd.f32 %v763, %v881
      %v883 = vpop.f32.mrb[0].mxu0
      %884 = vmatprep.mubr.bf16.mxu0 0
      %885 = vmatmul.mubr.bf16.gmra.mrb[0].mxu0 %v741
      %v886 = vpop.f32.mrb[0].mxu0
      %v887 = vadd.f32 %v763, %v886
      %v888 = vpop.f32.mrb[0].mxu0
      %v889 = vpop.f32.mrb[0].mxu0
      %v890 = vadd.f32 %v763, %v889
      %v891 = vpop.f32.mrb[0].mxu0
      %892 = vmatprep.mubr.bf16.mxu0 0
      %893 = vmatmul.mubr.bf16.gmra.mrb[0].mxu0 %v742
      %v894 = vpop.f32.mrb[0].mxu0
      %v895 = vadd.f32 %v763, %v894
      %v896 = vpop.f32.mrb[0].mxu0
      %v897 = vpop.f32.mrb[0].mxu0
      %v898 = vadd.f32 %v763, %v897
      %v899 = vpop.f32.mrb[0].mxu0
      %900 = vmatprep.mubr.bf16.mxu0 0
      %901 = vmatmul.mubr.bf16.gmra.mrb[0].mxu0 %v743
      %v902 = vpop.f32.mrb[0].mxu0
      %v903 = vadd.f32 %v763, %v902
      %v904 = vpop.f32.mrb[0].mxu0
      %v905 = vpop.f32.mrb[0].mxu0
      %v906 = vadd.f32 %v763, %v905
      %v907 = vpop.f32.mrb[0].mxu0
      %908 = vdwg.mxu0
      %909 = vadd.xlane.f32.xlu0 %v847
      %v910 = vpop.xlane.xlu0 %909
      %911 = vadd.xlane.f32.xlu0 %v850
      %v912 = vpop.xlane.xlu0 %911
      %913 = vadd.xlane.f32.xlu0 %v855
      %v914 = vpop.xlane.xlu0 %913
      %915 = vadd.xlane.f32.xlu0 %v858
      %v916 = vpop.xlane.xlu0 %915
      %917 = vadd.xlane.f32.xlu0 %v863
      %v918 = vpop.xlane.xlu0 %917
      %919 = vadd.xlane.f32.xlu0 %v866
      %v920 = vpop.xlane.xlu0 %919
      %921 = vadd.xlane.f32.xlu0 %v871
      %v922 = vpop.xlane.xlu0 %921
      %923 = vadd.xlane.f32.xlu0 %v874
      %v924 = vpop.xlane.xlu0 %923
      %925 = vadd.xlane.f32.xlu0 %v879
      %v926 = vpop.xlane.xlu0 %925
      %927 = vadd.xlane.f32.xlu0 %v882
      %v928 = vpop.xlane.xlu0 %927
      %929 = vadd.xlane.f32.xlu0 %v887
      %v930 = vpop.xlane.xlu0 %929
      %931 = vadd.xlane.f32.xlu0 %v890
      %v932 = vpop.xlane.xlu0 %931
      %933 = vadd.xlane.f32.xlu0 %v895
      %v934 = vpop.xlane.xlu0 %933
      %935 = vadd.xlane.f32.xlu0 %v898
      %v936 = vpop.xlane.xlu0 %935
      %937 = vadd.xlane.f32.xlu0 %v903
      %v938 = vpop.xlane.xlu0 %937
      %939 = vadd.xlane.f32.xlu0 %v906
      %v940 = vpop.xlane.xlu0 %939
      %v941 = vmul.f32 %v847, %v847
      %v942 = vmul.f32 %v850, %v850
      %v943 = vmul.f32 %v855, %v855
      %v944 = vmul.f32 %v858, %v858
      %v945 = vmul.f32 %v863, %v863
      %v946 = vmul.f32 %v866, %v866
      %v947 = vmul.f32 %v871, %v871
      %v948 = vmul.f32 %v874, %v874
      %v949 = vmul.f32 %v879, %v879
      %v950 = vmul.f32 %v882, %v882
      %v951 = vmul.f32 %v887, %v887
      %v952 = vmul.f32 %v890, %v890
      %v953 = vmul.f32 %v895, %v895
      %v954 = vmul.f32 %v898, %v898
      %v955 = vmul.f32 %v903, %v903
      %v956 = vmul.f32 %v906, %v906
      %957 = vadd.xlane.f32.xlu0 %v941
      %v958 = vpop.xlane.xlu0 %957
      %959 = vadd.xlane.f32.xlu0 %v942
      %v960 = vpop.xlane.xlu0 %959
      %961 = vadd.xlane.f32.xlu0 %v943
      %v962 = vpop.xlane.xlu0 %961
      %963 = vadd.xlane.f32.xlu0 %v944
      %v964 = vpop.xlane.xlu0 %963
      %965 = vadd.xlane.f32.xlu0 %v945
      %v966 = vpop.xlane.xlu0 %965
      %967 = vadd.xlane.f32.xlu0 %v946
      %v968 = vpop.xlane.xlu0 %967
      %969 = vadd.xlane.f32.xlu0 %v947
      %v970 = vpop.xlane.xlu0 %969
      %971 = vadd.xlane.f32.xlu0 %v948
      %v972 = vpop.xlane.xlu0 %971
      %973 = vadd.xlane.f32.xlu0 %v949
      %v974 = vpop.xlane.xlu0 %973
      %975 = vadd.xlane.f32.xlu0 %v950
      %v976 = vpop.xlane.xlu0 %975
      %977 = vadd.xlane.f32.xlu0 %v951
      %v978 = vpop.xlane.xlu0 %977
      %979 = vadd.xlane.f32.xlu0 %v952
      %v980 = vpop.xlane.xlu0 %979
      %981 = vadd.xlane.f32.xlu0 %v953
      %v982 = vpop.xlane.xlu0 %981
      %983 = vadd.xlane.f32.xlu0 %v954
      %v984 = vpop.xlane.xlu0 %983
      %985 = vadd.xlane.f32.xlu0 %v955
      %v986 = vpop.xlane.xlu0 %985
      %987 = vadd.xlane.f32.xlu0 %v956
      %v988 = vpop.xlane.xlu0 %987
      %v989 = vmul.f32 %v910, 0.0078125
      %v990 = vmul.f32 %v912, 0.0078125
      %v991 = vmul.f32 %v914, 0.0078125
      %v992 = vmul.f32 %v916, 0.0078125
      %v993 = vmul.f32 %v918, 0.0078125
      %v994 = vmul.f32 %v920, 0.0078125
      %v995 = vmul.f32 %v922, 0.0078125
      %v996 = vmul.f32 %v924, 0.0078125
      %v997 = vmul.f32 %v926, 0.0078125
      %v998 = vmul.f32 %v928, 0.0078125
      %v999 = vmul.f32 %v930, 0.0078125
      %v1000 = vmul.f32 %v932, 0.0078125
      %v1001 = vmul.f32 %v934, 0.0078125
      %v1002 = vmul.f32 %v936, 0.0078125
      %v1003 = vmul.f32 %v938, 0.0078125
      %v1004 = vmul.f32 %v940, 0.0078125
      %v1005 = vmul.f32 %v958, 0.0078125
      %v1006 = vmul.f32 %v960, 0.0078125
      %v1007 = vmul.f32 %v962, 0.0078125
      %v1008 = vmul.f32 %v964, 0.0078125
      %v1009 = vmul.f32 %v966, 0.0078125
      %v1010 = vmul.f32 %v968, 0.0078125
      %v1011 = vmul.f32 %v970, 0.0078125
      %v1012 = vmul.f32 %v972, 0.0078125
      %v1013 = vmul.f32 %v974, 0.0078125
      %v1014 = vmul.f32 %v976, 0.0078125
      %v1015 = vmul.f32 %v978, 0.0078125
      %v1016 = vmul.f32 %v980, 0.0078125
      %v1017 = vmul.f32 %v982, 0.0078125
      %v1018 = vmul.f32 %v984, 0.0078125
      %v1019 = vmul.f32 %v986, 0.0078125
      %v1020 = vmul.f32 %v988, 0.0078125
      %v1021 = vmul.f32 %v989, %v989
      %v1022 = vmul.f32 %v990, %v990
      %v1023 = vmul.f32 %v991, %v991
      %v1024 = vmul.f32 %v992, %v992
      %v1025 = vmul.f32 %v993, %v993
      %v1026 = vmul.f32 %v994, %v994
      %v1027 = vmul.f32 %v995, %v995
      %v1028 = vmul.f32 %v996, %v996
      %v1029 = vmul.f32 %v997, %v997
      %v1030 = vmul.f32 %v998, %v998
      %v1031 = vmul.f32 %v999, %v999
      %v1032 = vmul.f32 %v1000, %v1000
      %v1033 = vmul.f32 %v1001, %v1001
      %v1034 = vmul.f32 %v1002, %v1002
      %v1035 = vmul.f32 %v1003, %v1003
      %v1036 = vmul.f32 %v1004, %v1004
      %v1037 = vsub.f32 %v1005, %v1021
      %v1038 = vsub.f32 %v1006, %v1022
      %v1039 = vsub.f32 %v1007, %v1023
      %v1040 = vsub.f32 %v1008, %v1024
      %v1041 = vsub.f32 %v1009, %v1025
      %v1042 = vsub.f32 %v1010, %v1026
      %v1043 = vsub.f32 %v1011, %v1027
      %v1044 = vsub.f32 %v1012, %v1028
      %v1045 = vsub.f32 %v1013, %v1029
      %v1046 = vsub.f32 %v1014, %v1030
      %v1047 = vsub.f32 %v1015, %v1031
      %v1048 = vsub.f32 %v1016, %v1032
      %v1049 = vsub.f32 %v1017, %v1033
      %v1050 = vsub.f32 %v1018, %v1034
      %v1051 = vsub.f32 %v1019, %v1035
      %v1052 = vsub.f32 %v1020, %v1036
      %v1053 = vadd.f32 %v1037, 1e-05
      %v1054 = vadd.f32 %v1038, 1e-05
      %v1055 = vadd.f32 %v1039, 1e-05
      %v1056 = vadd.f32 %v1040, 1e-05
      %v1057 = vadd.f32 %v1041, 1e-05
      %v1058 = vadd.f32 %v1042, 1e-05
      %v1059 = vadd.f32 %v1043, 1e-05
      %v1060 = vadd.f32 %v1044, 1e-05
      %v1061 = vadd.f32 %v1045, 1e-05
      %v1062 = vadd.f32 %v1046, 1e-05
      %v1063 = vadd.f32 %v1047, 1e-05
      %v1064 = vadd.f32 %v1048, 1e-05
      %v1065 = vadd.f32 %v1049, 1e-05
      %v1066 = vadd.f32 %v1050, 1e-05
      %v1067 = vadd.f32 %v1051, 1e-05
      %v1068 = vadd.f32 %v1052, 1e-05
      %v1069 = vrsqrt.pop %v1053
      %v1070 = vrsqrt.pop %v1054
      %v1071 = vrsqrt.pop %v1055
      %v1072 = vrsqrt.pop %v1056
      %v1073 = vrsqrt.pop %v1057
      %v1074 = vrsqrt.pop %v1058
      %v1075 = vrsqrt.pop %v1059
      %v1076 = vrsqrt.pop %v1060
      %v1077 = vrsqrt.pop %v1061
      %v1078 = vrsqrt.pop %v1062
      %v1079 = vrsqrt.pop %v1063
      %v1080 = vrsqrt.pop %v1064
      %v1081 = vrsqrt.pop %v1065
      %v1082 = vrsqrt.pop %v1066
      %v1083 = vrsqrt.pop %v1067
      %v1084 = vrsqrt.pop %v1068
      %v1085 = vlaneseq
      %v1086 = vshrl.u32 %v1085, 7
      %v1087 = vsub.s32 1, %v1086
      %v1088 = vrot.slane %v735, %v1087
      %v1089 = vmul.f32 %v1088, %v1069
      %v1090 = vmul.f32 %v1088, %v1070
      %v1091 = vmul.f32 %v1088, %v1071
      %v1092 = vmul.f32 %v1088, %v1072
      %v1093 = vmul.f32 %v1088, %v1073
      %v1094 = vmul.f32 %v1088, %v1074
      %v1095 = vmul.f32 %v1088, %v1075
      %v1096 = vmul.f32 %v1088, %v1076
      %v1097 = vmul.f32 %v1088, %v1077
      %v1098 = vmul.f32 %v1088, %v1078
      %v1099 = vmul.f32 %v1088, %v1079
      %v1100 = vmul.f32 %v1088, %v1080
      %v1101 = vmul.f32 %v1088, %v1081
      %v1102 = vmul.f32 %v1088, %v1082
      %v1103 = vmul.f32 %v1088, %v1083
      %v1104 = vmul.f32 %v1088, %v1084
      %v1105 = vsub.f32 %v847, %v989
      %v1106 = vsub.f32 %v850, %v990
      %v1107 = vsub.f32 %v855, %v991
      %v1108 = vsub.f32 %v858, %v992
      %v1109 = vsub.f32 %v863, %v993
      %v1110 = vsub.f32 %v866, %v994
      %v1111 = vsub.f32 %v871, %v995
      %v1112 = vsub.f32 %v874, %v996
      %v1113 = vsub.f32 %v879, %v997
      %v1114 = vsub.f32 %v882, %v998
      %v1115 = vsub.f32 %v887, %v999
      %v1116 = vsub.f32 %v890, %v1000
      %v1117 = vsub.f32 %v895, %v1001
      %v1118 = vsub.f32 %v898, %v1002
      %v1119 = vsub.f32 %v903, %v1003
      %v1120 = vsub.f32 %v906, %v1004
      %v1121 = vmul.f32 %v1105, %v1089
      %v1122 = vmul.f32 %v1106, %v1090
      %v1123 = vmul.f32 %v1107, %v1091
      %v1124 = vmul.f32 %v1108, %v1092
      %v1125 = vmul.f32 %v1109, %v1093
      %v1126 = vmul.f32 %v1110, %v1094
      %v1127 = vmul.f32 %v1111, %v1095
      %v1128 = vmul.f32 %v1112, %v1096
      %v1129 = vmul.f32 %v1113, %v1097
      %v1130 = vmul.f32 %v1114, %v1098
      %v1131 = vmul.f32 %v1115, %v1099
      %v1132 = vmul.f32 %v1116, %v1100
      %v1133 = vmul.f32 %v1117, %v1101
      %v1134 = vmul.f32 %v1118, %v1102
      %v1135 = vmul.f32 %v1119, %v1103
      %v1136 = vmul.f32 %v1120, %v1104
      %v1137 = vlaneseq
      %v1138 = vshrl.u32 %v1137, 7
      %v1139 = vsub.s32 2, %v1138
      %v1140 = vrot.slane %v735, %v1139
      %v1141 = vadd.f32 %v1121, %v1140
      %v1142 = vadd.f32 %v1122, %v1140
      %v1143 = vadd.f32 %v1123, %v1140
      %v1144 = vadd.f32 %v1124, %v1140
      %v1145 = vadd.f32 %v1125, %v1140
      %v1146 = vadd.f32 %v1126, %v1140
      %v1147 = vadd.f32 %v1127, %v1140
      %v1148 = vadd.f32 %v1128, %v1140
      %v1149 = vadd.f32 %v1129, %v1140
      %v1150 = vadd.f32 %v1130, %v1140
      %v1151 = vadd.f32 %v1131, %v1140
      %v1152 = vadd.f32 %v1132, %v1140
      %v1153 = vadd.f32 %v1133, %v1140
      %v1154 = vadd.f32 %v1134, %v1140
      %v1155 = vadd.f32 %v1135, %v1140
      %v1156 = vadd.f32 %v1136, %v1140
      %v1157 = vmax.f32 %v1141, 0.0
      %v1158 = vmax.f32 %v1142, 0.0
      %v1159 = vmax.f32 %v1143, 0.0
      %v1160 = vmax.f32 %v1144, 0.0
      %v1161 = vmax.f32 %v1145, 0.0
      %v1162 = vmax.f32 %v1146, 0.0
      %v1163 = vmax.f32 %v1147, 0.0
      %v1164 = vmax.f32 %v1148, 0.0
      %v1165 = vmax.f32 %v1149, 0.0
      %v1166 = vmax.f32 %v1150, 0.0
      %v1167 = vmax.f32 %v1151, 0.0
      %v1168 = vmax.f32 %v1152, 0.0
      %v1169 = vmax.f32 %v1153, 0.0
      %v1170 = vmax.f32 %v1154, 0.0
      %v1171 = vmax.f32 %v1155, 0.0
      %v1172 = vmax.f32 %v1156, 0.0
      %v1173 = vpack.c.bf16 %v1158, %v1157
      %v1174 = vpack.c.bf16 %v1160, %v1159
      %v1175 = vpack.c.bf16 %v1162, %v1161
      %v1176 = vpack.c.bf16 %v1164, %v1163
      %v1177 = vpack.c.bf16 %v1166, %v1165
      %v1178 = vpack.c.bf16 %v1168, %v1167
      %v1179 = vpack.c.bf16 %v1170, %v1169
      %v1180 = vpack.c.bf16 %v1172, %v1171
      %v1181 = vld [vmem:[%s4] sm:$0xf]
      %v1182 = vld [vmem:[%s4 + $0x4] sm:$0xf]
      %v1183 = vld [vmem:[%s4 + $0x8] sm:$0xf]
      %v1184 = vld [vmem:[%s4 + $0xc] sm:$0xf]
      %v1185 = vld [vmem:[%s4 + $0x10] sm:$0xf]
      %v1186 = vld [vmem:[%s4 + $0x14] sm:$0xf]
      %v1187 = vld [vmem:[%s4 + $0x18] sm:$0xf]
      %v1188 = vld [vmem:[%s4 + $0x1c] sm:$0xf]
      %v1189 = vld [vmem:[%s4 + $0x20] sm:$0xf]
      %v1190 = vld [vmem:[%s4 + $0x24] sm:$0xf]
      %v1191 = vld [vmem:[%s4 + $0x28] sm:$0xf]
      %v1192 = vld [vmem:[%s4 + $0x2c] sm:$0xf]
      %v1193 = vld [vmem:[%s4 + $0x30] sm:$0xf]
      %v1194 = vld [vmem:[%s4 + $0x34] sm:$0xf]
      %v1195 = vld [vmem:[%s4 + $0x38] sm:$0xf]
      %v1196 = vld [vmem:[%s4 + $0x3c] sm:$0xf]
      %v1197 = vlaneseq
      %v1198 = vshrl.u32 %v1197, 7
      %v1199 = vsub.s32 3, %v1198
      %v1200 = vrot.slane %v735, %v1199
      %v1217 = vunpack.c.l.b16 %v1181
      %v1218 = vunpack.c.l.b16 %v1182
      %v1219 = vunpack.c.l.b16 %v1183
      %v1220 = vunpack.c.l.b16 %v1184
      %v1221 = vunpack.c.l.b16 %v1185
      %v1222 = vunpack.c.l.b16 %v1186
      %v1223 = vunpack.c.l.b16 %v1187
      %v1224 = vunpack.c.l.b16 %v1188
      %v1225 = vunpack.c.l.b16 %v1189
      %v1226 = vunpack.c.l.b16 %v1190
      %v1227 = vunpack.c.l.b16 %v1191
      %v1228 = vunpack.c.l.b16 %v1192
      %v1229 = vunpack.c.l.b16 %v1193
      %v1230 = vunpack.c.l.b16 %v1194
      %v1231 = vunpack.c.l.b16 %v1195
      %v1232 = vunpack.c.l.b16 %v1196
      %v1233 = vpack.c.b16 %v1218, %v1217
      %v1234 = vpack.c.b16 %v1220, %v1219
      %v1235 = vpack.c.b16 %v1222, %v1221
      %v1236 = vpack.c.b16 %v1224, %v1223
      %v1237 = vpack.c.b16 %v1226, %v1225
      %v1238 = vpack.c.b16 %v1228, %v1227
      %v1239 = vpack.c.b16 %v1230, %v1229
      %v1240 = vpack.c.b16 %v1232, %v1231
      %1249 = vmatprep.subr.bf16.mxu0 0
      %1250 = vmatpush1.bf16.msra.mxu0 %v1233
      %1251 = vmatprep.subr.bf16.mxu0 0
      %1252 = vmatpush1.bf16.msra.mxu0 %v1234
      %1253 = vmatprep.subr.bf16.mxu0 0
      %1254 = vmatpush1.bf16.msra.mxu0 %v1235
      %1255 = vmatprep.subr.bf16.mxu0 0
      %1256 = vmatpush1.bf16.msra.mxu0 %v1236
      %1257 = vmatprep.subr.bf16.mxu0 0
      %1258 = vmatpush1.bf16.msra.mxu0 %v1237
      %1259 = vmatprep.subr.bf16.mxu0 0
      %1260 = vmatpush1.bf16.msra.mxu0 %v1238
      %1261 = vmatprep.subr.bf16.mxu0 0
      %1262 = vmatpush1.bf16.msra.mxu0 %v1239
      %1263 = vmatprep.subr.bf16.mxu0 0
      %1264 = vmatpush1.bf16.msra.mxu0 %v1240
      %1265 = vmatprep.subr.bf16.mxu0 0
      %1266 = vmatpush1.bf16.msra.mxu0 0
      %1267 = vmatprep.subr.bf16.mxu0 0
      %1268 = vmatpush1.bf16.msra.mxu0 0
      %1269 = vmatprep.subr.bf16.mxu0 0
      %1270 = vmatpush1.bf16.msra.mxu0 0
      %1271 = vmatprep.subr.bf16.mxu0 0
      %1272 = vmatpush1.bf16.msra.mxu0 0
      %1273 = vmatprep.subr.bf16.mxu0 0
      %1274 = vmatpush1.bf16.msra.mxu0 0
      %1275 = vmatprep.subr.bf16.mxu0 0
      %1276 = vmatpush1.bf16.msra.mxu0 0
      %1277 = vmatprep.subr.bf16.mxu0 0
      %1278 = vmatpush1.bf16.msra.mxu0 0
      %1279 = vmatprep.subr.bf16.mxu0 0
      %1280 = vmatpush1.bf16.msra.mxu0 0
      %1281 = vmatprep.mubr.bf16.mxu0 0
      %1282 = vmatmul.mubr.bf16.gmra.mrb[0].mxu0 %v1173
      %v1283 = vpop.f32.mrb[0].mxu0
      %v1284 = vadd.f32 %v1200, %v1283
      %v1285 = vpop.f32.mrb[0].mxu0
      %v1286 = vpop.f32.mrb[0].mxu0
      %v1287 = vadd.f32 %v1200, %v1286
      %v1288 = vpop.f32.mrb[0].mxu0
      %1289 = vmatprep.mubr.bf16.mxu0 0
      %1290 = vmatmul.mubr.bf16.gmra.mrb[0].mxu0 %v1174
      %v1291 = vpop.f32.mrb[0].mxu0
      %v1292 = vadd.f32 %v1200, %v1291
      %v1293 = vpop.f32.mrb[0].mxu0
      %v1294 = vpop.f32.mrb[0].mxu0
      %v1295 = vadd.f32 %v1200, %v1294
      %v1296 = vpop.f32.mrb[0].mxu0
      %1297 = vmatprep.mubr.bf16.mxu0 0
      %1298 = vmatmul.mubr.bf16.gmra.mrb[0].mxu0 %v1175
      %v1299 = vpop.f32.mrb[0].mxu0
      %v1300 = vadd.f32 %v1200, %v1299
      %v1301 = vpop.f32.mrb[0].mxu0
      %v1302 = vpop.f32.mrb[0].mxu0
      %v1303 = vadd.f32 %v1200, %v1302
      %v1304 = vpop.f32.mrb[0].mxu0
      %1305 = vmatprep.mubr.bf16.mxu0 0
      %1306 = vmatmul.mubr.bf16.gmra.mrb[0].mxu0 %v1176
      %v1307 = vpop.f32.mrb[0].mxu0
      %v1308 = vadd.f32 %v1200, %v1307
      %v1309 = vpop.f32.mrb[0].mxu0
      %v1310 = vpop.f32.mrb[0].mxu0
      %v1311 = vadd.f32 %v1200, %v1310
      %v1312 = vpop.f32.mrb[0].mxu0
      %1313 = vmatprep.mubr.bf16.mxu0 0
      %1314 = vmatmul.mubr.bf16.gmra.mrb[0].mxu0 %v1177
      %v1315 = vpop.f32.mrb[0].mxu0
      %v1316 = vadd.f32 %v1200, %v1315
      %v1317 = vpop.f32.mrb[0].mxu0
      %v1318 = vpop.f32.mrb[0].mxu0
      %v1319 = vadd.f32 %v1200, %v1318
      %v1320 = vpop.f32.mrb[0].mxu0
      %1321 = vmatprep.mubr.bf16.mxu0 0
      %1322 = vmatmul.mubr.bf16.gmra.mrb[0].mxu0 %v1178
      %v1323 = vpop.f32.mrb[0].mxu0
      %v1324 = vadd.f32 %v1200, %v1323
      %v1325 = vpop.f32.mrb[0].mxu0
      %v1326 = vpop.f32.mrb[0].mxu0
      %v1327 = vadd.f32 %v1200, %v1326
      %v1328 = vpop.f32.mrb[0].mxu0
      %1329 = vmatprep.mubr.bf16.mxu0 0
      %1330 = vmatmul.mubr.bf16.gmra.mrb[0].mxu0 %v1179
      %v1331 = vpop.f32.mrb[0].mxu0
      %v1332 = vadd.f32 %v1200, %v1331
      %v1333 = vpop.f32.mrb[0].mxu0
      %v1334 = vpop.f32.mrb[0].mxu0
      %v1335 = vadd.f32 %v1200, %v1334
      %v1336 = vpop.f32.mrb[0].mxu0
      %1337 = vmatprep.mubr.bf16.mxu0 0
      %1338 = vmatmul.mubr.bf16.gmra.mrb[0].mxu0 %v1180
      %v1339 = vpop.f32.mrb[0].mxu0
      %v1340 = vadd.f32 %v1200, %v1339
      %v1341 = vpop.f32.mrb[0].mxu0
      %v1342 = vpop.f32.mrb[0].mxu0
      %v1343 = vadd.f32 %v1200, %v1342
      %v1344 = vpop.f32.mrb[0].mxu0
      %1345 = vdwg.mxu0
      %1346 = vadd.xlane.f32.xlu0 %v1284
      %v1347 = vpop.xlane.xlu0 %1346
      %1348 = vadd.xlane.f32.xlu0 %v1287
      %v1349 = vpop.xlane.xlu0 %1348
      %1350 = vadd.xlane.f32.xlu0 %v1292
      %v1351 = vpop.xlane.xlu0 %1350
      %1352 = vadd.xlane.f32.xlu0 %v1295
      %v1353 = vpop.xlane.xlu0 %1352
      %1354 = vadd.xlane.f32.xlu0 %v1300
      %v1355 = vpop.xlane.xlu0 %1354
      %1356 = vadd.xlane.f32.xlu0 %v1303
      %v1357 = vpop.xlane.xlu0 %1356
      %1358 = vadd.xlane.f32.xlu0 %v1308
      %v1359 = vpop.xlane.xlu0 %1358
      %1360 = vadd.xlane.f32.xlu0 %v1311
      %v1361 = vpop.xlane.xlu0 %1360
      %1362 = vadd.xlane.f32.xlu0 %v1316
      %v1363 = vpop.xlane.xlu0 %1362
      %1364 = vadd.xlane.f32.xlu0 %v1319
      %v1365 = vpop.xlane.xlu0 %1364
      %1366 = vadd.xlane.f32.xlu0 %v1324
      %v1367 = vpop.xlane.xlu0 %1366
      %1368 = vadd.xlane.f32.xlu0 %v1327
      %v1369 = vpop.xlane.xlu0 %1368
      %1370 = vadd.xlane.f32.xlu0 %v1332
      %v1371 = vpop.xlane.xlu0 %1370
      %1372 = vadd.xlane.f32.xlu0 %v1335
      %v1373 = vpop.xlane.xlu0 %1372
      %1374 = vadd.xlane.f32.xlu0 %v1340
      %v1375 = vpop.xlane.xlu0 %1374
      %1376 = vadd.xlane.f32.xlu0 %v1343
      %v1377 = vpop.xlane.xlu0 %1376
      %v1378 = vmul.f32 %v1284, %v1284
      %v1379 = vmul.f32 %v1287, %v1287
      %v1380 = vmul.f32 %v1292, %v1292
      %v1381 = vmul.f32 %v1295, %v1295
      %v1382 = vmul.f32 %v1300, %v1300
      %v1383 = vmul.f32 %v1303, %v1303
      %v1384 = vmul.f32 %v1308, %v1308
      %v1385 = vmul.f32 %v1311, %v1311
      %v1386 = vmul.f32 %v1316, %v1316
      %v1387 = vmul.f32 %v1319, %v1319
      %v1388 = vmul.f32 %v1324, %v1324
      %v1389 = vmul.f32 %v1327, %v1327
      %v1390 = vmul.f32 %v1332, %v1332
      %v1391 = vmul.f32 %v1335, %v1335
      %v1392 = vmul.f32 %v1340, %v1340
      %v1393 = vmul.f32 %v1343, %v1343
      %1394 = vadd.xlane.f32.xlu0 %v1378
      %v1395 = vpop.xlane.xlu0 %1394
      %1396 = vadd.xlane.f32.xlu0 %v1379
      %v1397 = vpop.xlane.xlu0 %1396
      %1398 = vadd.xlane.f32.xlu0 %v1380
      %v1399 = vpop.xlane.xlu0 %1398
      %1400 = vadd.xlane.f32.xlu0 %v1381
      %v1401 = vpop.xlane.xlu0 %1400
      %1402 = vadd.xlane.f32.xlu0 %v1382
      %v1403 = vpop.xlane.xlu0 %1402
      %1404 = vadd.xlane.f32.xlu0 %v1383
      %v1405 = vpop.xlane.xlu0 %1404
      %1406 = vadd.xlane.f32.xlu0 %v1384
      %v1407 = vpop.xlane.xlu0 %1406
      %1408 = vadd.xlane.f32.xlu0 %v1385
      %v1409 = vpop.xlane.xlu0 %1408
      %1410 = vadd.xlane.f32.xlu0 %v1386
      %v1411 = vpop.xlane.xlu0 %1410
      %1412 = vadd.xlane.f32.xlu0 %v1387
      %v1413 = vpop.xlane.xlu0 %1412
      %1414 = vadd.xlane.f32.xlu0 %v1388
      %v1415 = vpop.xlane.xlu0 %1414
      %1416 = vadd.xlane.f32.xlu0 %v1389
      %v1417 = vpop.xlane.xlu0 %1416
      %1418 = vadd.xlane.f32.xlu0 %v1390
      %v1419 = vpop.xlane.xlu0 %1418
      %1420 = vadd.xlane.f32.xlu0 %v1391
      %v1421 = vpop.xlane.xlu0 %1420
      %1422 = vadd.xlane.f32.xlu0 %v1392
      %v1423 = vpop.xlane.xlu0 %1422
      %1424 = vadd.xlane.f32.xlu0 %v1393
      %v1425 = vpop.xlane.xlu0 %1424
      %v1426 = vmul.f32 %v1347, 0.0078125
      %v1427 = vmul.f32 %v1349, 0.0078125
      %v1428 = vmul.f32 %v1351, 0.0078125
      %v1429 = vmul.f32 %v1353, 0.0078125
      %v1430 = vmul.f32 %v1355, 0.0078125
      %v1431 = vmul.f32 %v1357, 0.0078125
      %v1432 = vmul.f32 %v1359, 0.0078125
      %v1433 = vmul.f32 %v1361, 0.0078125
      %v1434 = vmul.f32 %v1363, 0.0078125
      %v1435 = vmul.f32 %v1365, 0.0078125
      %v1436 = vmul.f32 %v1367, 0.0078125
      %v1437 = vmul.f32 %v1369, 0.0078125
      %v1438 = vmul.f32 %v1371, 0.0078125
      %v1439 = vmul.f32 %v1373, 0.0078125
      %v1440 = vmul.f32 %v1375, 0.0078125
      %v1441 = vmul.f32 %v1377, 0.0078125
      %v1442 = vmul.f32 %v1395, 0.0078125
      %v1443 = vmul.f32 %v1397, 0.0078125
      %v1444 = vmul.f32 %v1399, 0.0078125
      %v1445 = vmul.f32 %v1401, 0.0078125
      %v1446 = vmul.f32 %v1403, 0.0078125
      %v1447 = vmul.f32 %v1405, 0.0078125
      %v1448 = vmul.f32 %v1407, 0.0078125
      %v1449 = vmul.f32 %v1409, 0.0078125
      %v1450 = vmul.f32 %v1411, 0.0078125
      %v1451 = vmul.f32 %v1413, 0.0078125
      %v1452 = vmul.f32 %v1415, 0.0078125
      %v1453 = vmul.f32 %v1417, 0.0078125
      %v1454 = vmul.f32 %v1419, 0.0078125
      %v1455 = vmul.f32 %v1421, 0.0078125
      %v1456 = vmul.f32 %v1423, 0.0078125
      %v1457 = vmul.f32 %v1425, 0.0078125
      %v1458 = vmul.f32 %v1426, %v1426
      %v1459 = vmul.f32 %v1427, %v1427
      %v1460 = vmul.f32 %v1428, %v1428
      %v1461 = vmul.f32 %v1429, %v1429
      %v1462 = vmul.f32 %v1430, %v1430
      %v1463 = vmul.f32 %v1431, %v1431
      %v1464 = vmul.f32 %v1432, %v1432
      %v1465 = vmul.f32 %v1433, %v1433
      %v1466 = vmul.f32 %v1434, %v1434
      %v1467 = vmul.f32 %v1435, %v1435
      %v1468 = vmul.f32 %v1436, %v1436
      %v1469 = vmul.f32 %v1437, %v1437
      %v1470 = vmul.f32 %v1438, %v1438
      %v1471 = vmul.f32 %v1439, %v1439
      %v1472 = vmul.f32 %v1440, %v1440
      %v1473 = vmul.f32 %v1441, %v1441
      %v1474 = vsub.f32 %v1442, %v1458
      %v1475 = vsub.f32 %v1443, %v1459
      %v1476 = vsub.f32 %v1444, %v1460
      %v1477 = vsub.f32 %v1445, %v1461
      %v1478 = vsub.f32 %v1446, %v1462
      %v1479 = vsub.f32 %v1447, %v1463
      %v1480 = vsub.f32 %v1448, %v1464
      %v1481 = vsub.f32 %v1449, %v1465
      %v1482 = vsub.f32 %v1450, %v1466
      %v1483 = vsub.f32 %v1451, %v1467
      %v1484 = vsub.f32 %v1452, %v1468
      %v1485 = vsub.f32 %v1453, %v1469
      %v1486 = vsub.f32 %v1454, %v1470
      %v1487 = vsub.f32 %v1455, %v1471
      %v1488 = vsub.f32 %v1456, %v1472
      %v1489 = vsub.f32 %v1457, %v1473
      %v1490 = vadd.f32 %v1474, 1e-05
      %v1491 = vadd.f32 %v1475, 1e-05
      %v1492 = vadd.f32 %v1476, 1e-05
      %v1493 = vadd.f32 %v1477, 1e-05
      %v1494 = vadd.f32 %v1478, 1e-05
      %v1495 = vadd.f32 %v1479, 1e-05
      %v1496 = vadd.f32 %v1480, 1e-05
      %v1497 = vadd.f32 %v1481, 1e-05
      %v1498 = vadd.f32 %v1482, 1e-05
      %v1499 = vadd.f32 %v1483, 1e-05
      %v1500 = vadd.f32 %v1484, 1e-05
      %v1501 = vadd.f32 %v1485, 1e-05
      %v1502 = vadd.f32 %v1486, 1e-05
      %v1503 = vadd.f32 %v1487, 1e-05
      %v1504 = vadd.f32 %v1488, 1e-05
      %v1505 = vadd.f32 %v1489, 1e-05
      %v1506 = vrsqrt.pop %v1490
      %v1507 = vrsqrt.pop %v1491
      %v1508 = vrsqrt.pop %v1492
      %v1509 = vrsqrt.pop %v1493
      %v1510 = vrsqrt.pop %v1494
      %v1511 = vrsqrt.pop %v1495
      %v1512 = vrsqrt.pop %v1496
      %v1513 = vrsqrt.pop %v1497
      %v1514 = vrsqrt.pop %v1498
      %v1515 = vrsqrt.pop %v1499
      %v1516 = vrsqrt.pop %v1500
      %v1517 = vrsqrt.pop %v1501
      %v1518 = vrsqrt.pop %v1502
      %v1519 = vrsqrt.pop %v1503
      %v1520 = vrsqrt.pop %v1504
      %v1521 = vrsqrt.pop %v1505
      %v1522 = vlaneseq
      %v1523 = vshrl.u32 %v1522, 7
      %v1524 = vsub.s32 4, %v1523
      %v1525 = vrot.slane %v735, %v1524
      %v1526 = vmul.f32 %v1525, %v1506
      %v1527 = vmul.f32 %v1525, %v1507
      %v1528 = vmul.f32 %v1525, %v1508
      %v1529 = vmul.f32 %v1525, %v1509
      %v1530 = vmul.f32 %v1525, %v1510
      %v1531 = vmul.f32 %v1525, %v1511
      %v1532 = vmul.f32 %v1525, %v1512
      %v1533 = vmul.f32 %v1525, %v1513
      %v1534 = vmul.f32 %v1525, %v1514
      %v1535 = vmul.f32 %v1525, %v1515
      %v1536 = vmul.f32 %v1525, %v1516
      %v1537 = vmul.f32 %v1525, %v1517
      %v1538 = vmul.f32 %v1525, %v1518
      %v1539 = vmul.f32 %v1525, %v1519
      %v1540 = vmul.f32 %v1525, %v1520
      %v1541 = vmul.f32 %v1525, %v1521
      %v1542 = vsub.f32 %v1284, %v1426
      %v1543 = vsub.f32 %v1287, %v1427
      %v1544 = vsub.f32 %v1292, %v1428
      %v1545 = vsub.f32 %v1295, %v1429
      %v1546 = vsub.f32 %v1300, %v1430
      %v1547 = vsub.f32 %v1303, %v1431
      %v1548 = vsub.f32 %v1308, %v1432
      %v1549 = vsub.f32 %v1311, %v1433
      %v1550 = vsub.f32 %v1316, %v1434
      %v1551 = vsub.f32 %v1319, %v1435
      %v1552 = vsub.f32 %v1324, %v1436
      %v1553 = vsub.f32 %v1327, %v1437
      %v1554 = vsub.f32 %v1332, %v1438
      %v1555 = vsub.f32 %v1335, %v1439
      %v1556 = vsub.f32 %v1340, %v1440
      %v1557 = vsub.f32 %v1343, %v1441
      %v1558 = vmul.f32 %v1542, %v1526
      %v1559 = vmul.f32 %v1543, %v1527
      %v1560 = vmul.f32 %v1544, %v1528
      %v1561 = vmul.f32 %v1545, %v1529
      %v1562 = vmul.f32 %v1546, %v1530
      %v1563 = vmul.f32 %v1547, %v1531
      %v1564 = vmul.f32 %v1548, %v1532
      %v1565 = vmul.f32 %v1549, %v1533
      %v1566 = vmul.f32 %v1550, %v1534
      %v1567 = vmul.f32 %v1551, %v1535
      %v1568 = vmul.f32 %v1552, %v1536
      %v1569 = vmul.f32 %v1553, %v1537
      %v1570 = vmul.f32 %v1554, %v1538
      %v1571 = vmul.f32 %v1555, %v1539
      %v1572 = vmul.f32 %v1556, %v1540
      %v1573 = vmul.f32 %v1557, %v1541
      %v1574 = vlaneseq
      %v1575 = vshrl.u32 %v1574, 7
      %v1576 = vsub.s32 5, %v1575
      %v1577 = vrot.slane %v735, %v1576
      %v1578 = vadd.f32 %v1558, %v1577
      %v1579 = vadd.f32 %v1559, %v1577
      %v1580 = vadd.f32 %v1560, %v1577
      %v1581 = vadd.f32 %v1561, %v1577
      %v1582 = vadd.f32 %v1562, %v1577
      %v1583 = vadd.f32 %v1563, %v1577
      %v1584 = vadd.f32 %v1564, %v1577
      %v1585 = vadd.f32 %v1565, %v1577
      %v1586 = vadd.f32 %v1566, %v1577
      %v1587 = vadd.f32 %v1567, %v1577
      %v1588 = vadd.f32 %v1568, %v1577
      %v1589 = vadd.f32 %v1569, %v1577
      %v1590 = vadd.f32 %v1570, %v1577
      %v1591 = vadd.f32 %v1571, %v1577
      %v1592 = vadd.f32 %v1572, %v1577
      %v1593 = vadd.f32 %v1573, %v1577
      %v1594 = vadd.f32 %v719, %v1578
      %v1595 = vadd.f32 %v720, %v1579
      %v1596 = vadd.f32 %v721, %v1580
      %v1597 = vadd.f32 %v722, %v1581
      %v1598 = vadd.f32 %v723, %v1582
      %v1599 = vadd.f32 %v724, %v1583
      %v1600 = vadd.f32 %v725, %v1584
      %v1601 = vadd.f32 %v726, %v1585
      %v1602 = vadd.f32 %v727, %v1586
      %v1603 = vadd.f32 %v728, %v1587
      %v1604 = vadd.f32 %v729, %v1588
      %v1605 = vadd.f32 %v730, %v1589
      %v1606 = vadd.f32 %v731, %v1590
      %v1607 = vadd.f32 %v732, %v1591
      %v1608 = vadd.f32 %v733, %v1592
      %v1609 = vadd.f32 %v734, %v1593
      %s1610 = scalar_lea.vmem %s5, 8
      %v1611 = vld [vmem:[%s1610] sm:$0xff]
      %v1612 = vpack.c.bf16 %v1595, %v1594
      %v1613 = vpack.c.bf16 %v1597, %v1596
      %v1614 = vpack.c.bf16 %v1599, %v1598
      %v1615 = vpack.c.bf16 %v1601, %v1600
      %v1616 = vpack.c.bf16 %v1603, %v1602
      %v1617 = vpack.c.bf16 %v1605, %v1604
      %v1618 = vpack.c.bf16 %v1607, %v1606
      %v1619 = vpack.c.bf16 %v1609, %v1608
      %s1620 = scalar_lea.vmem %s3, 64
      %v1621 = vld [vmem:[%s1620] sm:$0xf]
      %v1622 = vld [vmem:[%s1620 + $0x4] sm:$0xf]
      %v1623 = vld [vmem:[%s1620 + $0x8] sm:$0xf]
      %v1624 = vld [vmem:[%s1620 + $0xc] sm:$0xf]
      %v1625 = vld [vmem:[%s1620 + $0x10] sm:$0xf]
      %v1626 = vld [vmem:[%s1620 + $0x14] sm:$0xf]
      %v1627 = vld [vmem:[%s1620 + $0x18] sm:$0xf]
      %v1628 = vld [vmem:[%s1620 + $0x1c] sm:$0xf]
      %v1629 = vld [vmem:[%s1620 + $0x20] sm:$0xf]
      %v1630 = vld [vmem:[%s1620 + $0x24] sm:$0xf]
      %v1631 = vld [vmem:[%s1620 + $0x28] sm:$0xf]
      %v1632 = vld [vmem:[%s1620 + $0x2c] sm:$0xf]
      %v1633 = vld [vmem:[%s1620 + $0x30] sm:$0xf]
      %v1634 = vld [vmem:[%s1620 + $0x34] sm:$0xf]
      %v1635 = vld [vmem:[%s1620 + $0x38] sm:$0xf]
      %v1636 = vld [vmem:[%s1620 + $0x3c] sm:$0xf]
      %v1637 = vlaneseq
      %v1638 = vshrl.u32 %v1637, 7
      %v1639 = vsub.s32 0, %v1638
      %v1640 = vrot.slane %v1611, %v1639
      %v1657 = vunpack.c.l.b16 %v1621
      %v1658 = vunpack.c.l.b16 %v1622
      %v1659 = vunpack.c.l.b16 %v1623
      %v1660 = vunpack.c.l.b16 %v1624
      %v1661 = vunpack.c.l.b16 %v1625
      %v1662 = vunpack.c.l.b16 %v1626
      %v1663 = vunpack.c.l.b16 %v1627
      %v1664 = vunpack.c.l.b16 %v1628
      %v1665 = vunpack.c.l.b16 %v1629
      %v1666 = vunpack.c.l.b16 %v1630
      %v1667 = vunpack.c.l.b16 %v1631
      %v1668 = vunpack.c.l.b16 %v1632
      %v1669 = vunpack.c.l.b16 %v1633
      %v1670 = vunpack.c.l.b16 %v1634
      %v1671 = vunpack.c.l.b16 %v1635
      %v1672 = vunpack.c.l.b16 %v1636
      %v1673 = vpack.c.b16 %v1658, %v1657
      %v1674 = vpack.c.b16 %v1660, %v1659
      %v1675 = vpack.c.b16 %v1662, %v1661
      %v1676 = vpack.c.b16 %v1664, %v1663
      %v1677 = vpack.c.b16 %v1666, %v1665
      %v1678 = vpack.c.b16 %v1668, %v1667
      %v1679 = vpack.c.b16 %v1670, %v1669
      %v1680 = vpack.c.b16 %v1672, %v1671
      %1689 = vmatprep.subr.bf16.mxu0 0
      %1690 = vmatpush1.bf16.msra.mxu0 %v1673
      %1691 = vmatprep.subr.bf16.mxu0 0
      %1692 = vmatpush1.bf16.msra.mxu0 %v1674
      %1693 = vmatprep.subr.bf16.mxu0 0
      %1694 = vmatpush1.bf16.msra.mxu0 %v1675
      %1695 = vmatprep.subr.bf16.mxu0 0
      %1696 = vmatpush1.bf16.msra.mxu0 %v1676
      %1697 = vmatprep.subr.bf16.mxu0 0
      %1698 = vmatpush1.bf16.msra.mxu0 %v1677
      %1699 = vmatprep.subr.bf16.mxu0 0
      %1700 = vmatpush1.bf16.msra.mxu0 %v1678
      %1701 = vmatprep.subr.bf16.mxu0 0
      %1702 = vmatpush1.bf16.msra.mxu0 %v1679
      %1703 = vmatprep.subr.bf16.mxu0 0
      %1704 = vmatpush1.bf16.msra.mxu0 %v1680
      %1705 = vmatprep.subr.bf16.mxu0 0
      %1706 = vmatpush1.bf16.msra.mxu0 0
      %1707 = vmatprep.subr.bf16.mxu0 0
      %1708 = vmatpush1.bf16.msra.mxu0 0
      %1709 = vmatprep.subr.bf16.mxu0 0
      %1710 = vmatpush1.bf16.msra.mxu0 0
      %1711 = vmatprep.subr.bf16.mxu0 0
      %1712 = vmatpush1.bf16.msra.mxu0 0
      %1713 = vmatprep.subr.bf16.mxu0 0
      %1714 = vmatpush1.bf16.msra.mxu0 0
      %1715 = vmatprep.subr.bf16.mxu0 0
      %1716 = vmatpush1.bf16.msra.mxu0 0
      %1717 = vmatprep.subr.bf16.mxu0 0
      %1718 = vmatpush1.bf16.msra.mxu0 0
      %1719 = vmatprep.subr.bf16.mxu0 0
      %1720 = vmatpush1.bf16.msra.mxu0 0
      %1721 = vmatprep.mubr.bf16.mxu0 0
      %1722 = vmatmul.mubr.bf16.gmra.mrb[0].mxu0 %v1612
      %v1723 = vpop.f32.mrb[0].mxu0
      %v1724 = vadd.f32 %v1640, %v1723
      %v1725 = vpop.f32.mrb[0].mxu0
      %v1726 = vpop.f32.mrb[0].mxu0
      %v1727 = vadd.f32 %v1640, %v1726
      %v1728 = vpop.f32.mrb[0].mxu0
      %1729 = vmatprep.mubr.bf16.mxu0 0
      %1730 = vmatmul.mubr.bf16.gmra.mrb[0].mxu0 %v1613
      %v1731 = vpop.f32.mrb[0].mxu0
      %v1732 = vadd.f32 %v1640, %v1731
      %v1733 = vpop.f32.mrb[0].mxu0
      %v1734 = vpop.f32.mrb[0].mxu0
      %v1735 = vadd.f32 %v1640, %v1734
      %v1736 = vpop.f32.mrb[0].mxu0
      %1737 = vmatprep.mubr.bf16.mxu0 0
      %1738 = vmatmul.mubr.bf16.gmra.mrb[0].mxu0 %v1614
      %v1739 = vpop.f32.mrb[0].mxu0
      %v1740 = vadd.f32 %v1640, %v1739
      %v1741 = vpop.f32.mrb[0].mxu0
      %v1742 = vpop.f32.mrb[0].mxu0
      %v1743 = vadd.f32 %v1640, %v1742
      %v1744 = vpop.f32.mrb[0].mxu0
      %1745 = vmatprep.mubr.bf16.mxu0 0
      %1746 = vmatmul.mubr.bf16.gmra.mrb[0].mxu0 %v1615
      %v1747 = vpop.f32.mrb[0].mxu0
      %v1748 = vadd.f32 %v1640, %v1747
      %v1749 = vpop.f32.mrb[0].mxu0
      %v1750 = vpop.f32.mrb[0].mxu0
      %v1751 = vadd.f32 %v1640, %v1750
      %v1752 = vpop.f32.mrb[0].mxu0
      %1753 = vmatprep.mubr.bf16.mxu0 0
      %1754 = vmatmul.mubr.bf16.gmra.mrb[0].mxu0 %v1616
      %v1755 = vpop.f32.mrb[0].mxu0
      %v1756 = vadd.f32 %v1640, %v1755
      %v1757 = vpop.f32.mrb[0].mxu0
      %v1758 = vpop.f32.mrb[0].mxu0
      %v1759 = vadd.f32 %v1640, %v1758
      %v1760 = vpop.f32.mrb[0].mxu0
      %1761 = vmatprep.mubr.bf16.mxu0 0
      %1762 = vmatmul.mubr.bf16.gmra.mrb[0].mxu0 %v1617
      %v1763 = vpop.f32.mrb[0].mxu0
      %v1764 = vadd.f32 %v1640, %v1763
      %v1765 = vpop.f32.mrb[0].mxu0
      %v1766 = vpop.f32.mrb[0].mxu0
      %v1767 = vadd.f32 %v1640, %v1766
      %v1768 = vpop.f32.mrb[0].mxu0
      %1769 = vmatprep.mubr.bf16.mxu0 0
      %1770 = vmatmul.mubr.bf16.gmra.mrb[0].mxu0 %v1618
      %v1771 = vpop.f32.mrb[0].mxu0
      %v1772 = vadd.f32 %v1640, %v1771
      %v1773 = vpop.f32.mrb[0].mxu0
      %v1774 = vpop.f32.mrb[0].mxu0
      %v1775 = vadd.f32 %v1640, %v1774
      %v1776 = vpop.f32.mrb[0].mxu0
      %1777 = vmatprep.mubr.bf16.mxu0 0
      %1778 = vmatmul.mubr.bf16.gmra.mrb[0].mxu0 %v1619
      %v1779 = vpop.f32.mrb[0].mxu0
      %v1780 = vadd.f32 %v1640, %v1779
      %v1781 = vpop.f32.mrb[0].mxu0
      %v1782 = vpop.f32.mrb[0].mxu0
      %v1783 = vadd.f32 %v1640, %v1782
      %v1784 = vpop.f32.mrb[0].mxu0
      %1785 = vdwg.mxu0
      %1786 = vadd.xlane.f32.xlu0 %v1724
      %v1787 = vpop.xlane.xlu0 %1786
      %1788 = vadd.xlane.f32.xlu0 %v1727
      %v1789 = vpop.xlane.xlu0 %1788
      %1790 = vadd.xlane.f32.xlu0 %v1732
      %v1791 = vpop.xlane.xlu0 %1790
      %1792 = vadd.xlane.f32.xlu0 %v1735
      %v1793 = vpop.xlane.xlu0 %1792
      %1794 = vadd.xlane.f32.xlu0 %v1740
      %v1795 = vpop.xlane.xlu0 %1794
      %1796 = vadd.xlane.f32.xlu0 %v1743
      %v1797 = vpop.xlane.xlu0 %1796
      %1798 = vadd.xlane.f32.xlu0 %v1748
      %v1799 = vpop.xlane.xlu0 %1798
      %1800 = vadd.xlane.f32.xlu0 %v1751
      %v1801 = vpop.xlane.xlu0 %1800
      %1802 = vadd.xlane.f32.xlu0 %v1756
      %v1803 = vpop.xlane.xlu0 %1802
      %1804 = vadd.xlane.f32.xlu0 %v1759
      %v1805 = vpop.xlane.xlu0 %1804
      %1806 = vadd.xlane.f32.xlu0 %v1764
      %v1807 = vpop.xlane.xlu0 %1806
      %1808 = vadd.xlane.f32.xlu0 %v1767
      %v1809 = vpop.xlane.xlu0 %1808
      %1810 = vadd.xlane.f32.xlu0 %v1772
      %v1811 = vpop.xlane.xlu0 %1810
      %1812 = vadd.xlane.f32.xlu0 %v1775
      %v1813 = vpop.xlane.xlu0 %1812
      %1814 = vadd.xlane.f32.xlu0 %v1780
      %v1815 = vpop.xlane.xlu0 %1814
      %1816 = vadd.xlane.f32.xlu0 %v1783
      %v1817 = vpop.xlane.xlu0 %1816
      %v1818 = vmul.f32 %v1724, %v1724
      %v1819 = vmul.f32 %v1727, %v1727
      %v1820 = vmul.f32 %v1732, %v1732
      %v1821 = vmul.f32 %v1735, %v1735
      %v1822 = vmul.f32 %v1740, %v1740
      %v1823 = vmul.f32 %v1743, %v1743
      %v1824 = vmul.f32 %v1748, %v1748
      %v1825 = vmul.f32 %v1751, %v1751
      %v1826 = vmul.f32 %v1756, %v1756
      %v1827 = vmul.f32 %v1759, %v1759
      %v1828 = vmul.f32 %v1764, %v1764
      %v1829 = vmul.f32 %v1767, %v1767
      %v1830 = vmul.f32 %v1772, %v1772
      %v1831 = vmul.f32 %v1775, %v1775
      %v1832 = vmul.f32 %v1780, %v1780
      %v1833 = vmul.f32 %v1783, %v1783
      %1834 = vadd.xlane.f32.xlu0 %v1818
      %v1835 = vpop.xlane.xlu0 %1834
      %1836 = vadd.xlane.f32.xlu0 %v1819
      %v1837 = vpop.xlane.xlu0 %1836
      %1838 = vadd.xlane.f32.xlu0 %v1820
      %v1839 = vpop.xlane.xlu0 %1838
      %1840 = vadd.xlane.f32.xlu0 %v1821
      %v1841 = vpop.xlane.xlu0 %1840
      %1842 = vadd.xlane.f32.xlu0 %v1822
      %v1843 = vpop.xlane.xlu0 %1842
      %1844 = vadd.xlane.f32.xlu0 %v1823
      %v1845 = vpop.xlane.xlu0 %1844
      %1846 = vadd.xlane.f32.xlu0 %v1824
      %v1847 = vpop.xlane.xlu0 %1846
      %1848 = vadd.xlane.f32.xlu0 %v1825
      %v1849 = vpop.xlane.xlu0 %1848
      %1850 = vadd.xlane.f32.xlu0 %v1826
      %v1851 = vpop.xlane.xlu0 %1850
      %1852 = vadd.xlane.f32.xlu0 %v1827
      %v1853 = vpop.xlane.xlu0 %1852
      %1854 = vadd.xlane.f32.xlu0 %v1828
      %v1855 = vpop.xlane.xlu0 %1854
      %1856 = vadd.xlane.f32.xlu0 %v1829
      %v1857 = vpop.xlane.xlu0 %1856
      %1858 = vadd.xlane.f32.xlu0 %v1830
      %v1859 = vpop.xlane.xlu0 %1858
      %1860 = vadd.xlane.f32.xlu0 %v1831
      %v1861 = vpop.xlane.xlu0 %1860
      %1862 = vadd.xlane.f32.xlu0 %v1832
      %v1863 = vpop.xlane.xlu0 %1862
      %1864 = vadd.xlane.f32.xlu0 %v1833
      %v1865 = vpop.xlane.xlu0 %1864
      %v1866 = vmul.f32 %v1787, 0.0078125
      %v1867 = vmul.f32 %v1789, 0.0078125
      %v1868 = vmul.f32 %v1791, 0.0078125
      %v1869 = vmul.f32 %v1793, 0.0078125
      %v1870 = vmul.f32 %v1795, 0.0078125
      %v1871 = vmul.f32 %v1797, 0.0078125
      %v1872 = vmul.f32 %v1799, 0.0078125
      %v1873 = vmul.f32 %v1801, 0.0078125
      %v1874 = vmul.f32 %v1803, 0.0078125
      %v1875 = vmul.f32 %v1805, 0.0078125
      %v1876 = vmul.f32 %v1807, 0.0078125
      %v1877 = vmul.f32 %v1809, 0.0078125
      %v1878 = vmul.f32 %v1811, 0.0078125
      %v1879 = vmul.f32 %v1813, 0.0078125
      %v1880 = vmul.f32 %v1815, 0.0078125
      %v1881 = vmul.f32 %v1817, 0.0078125
      %v1882 = vmul.f32 %v1835, 0.0078125
      %v1883 = vmul.f32 %v1837, 0.0078125
      %v1884 = vmul.f32 %v1839, 0.0078125
      %v1885 = vmul.f32 %v1841, 0.0078125
      %v1886 = vmul.f32 %v1843, 0.0078125
      %v1887 = vmul.f32 %v1845, 0.0078125
      %v1888 = vmul.f32 %v1847, 0.0078125
      %v1889 = vmul.f32 %v1849, 0.0078125
      %v1890 = vmul.f32 %v1851, 0.0078125
      %v1891 = vmul.f32 %v1853, 0.0078125
      %v1892 = vmul.f32 %v1855, 0.0078125
      %v1893 = vmul.f32 %v1857, 0.0078125
      %v1894 = vmul.f32 %v1859, 0.0078125
      %v1895 = vmul.f32 %v1861, 0.0078125
      %v1896 = vmul.f32 %v1863, 0.0078125
      %v1897 = vmul.f32 %v1865, 0.0078125
      %v1898 = vmul.f32 %v1866, %v1866
      %v1899 = vmul.f32 %v1867, %v1867
      %v1900 = vmul.f32 %v1868, %v1868
      %v1901 = vmul.f32 %v1869, %v1869
      %v1902 = vmul.f32 %v1870, %v1870
      %v1903 = vmul.f32 %v1871, %v1871
      %v1904 = vmul.f32 %v1872, %v1872
      %v1905 = vmul.f32 %v1873, %v1873
      %v1906 = vmul.f32 %v1874, %v1874
      %v1907 = vmul.f32 %v1875, %v1875
      %v1908 = vmul.f32 %v1876, %v1876
      %v1909 = vmul.f32 %v1877, %v1877
      %v1910 = vmul.f32 %v1878, %v1878
      %v1911 = vmul.f32 %v1879, %v1879
      %v1912 = vmul.f32 %v1880, %v1880
      %v1913 = vmul.f32 %v1881, %v1881
      %v1914 = vsub.f32 %v1882, %v1898
      %v1915 = vsub.f32 %v1883, %v1899
      %v1916 = vsub.f32 %v1884, %v1900
      %v1917 = vsub.f32 %v1885, %v1901
      %v1918 = vsub.f32 %v1886, %v1902
      %v1919 = vsub.f32 %v1887, %v1903
      %v1920 = vsub.f32 %v1888, %v1904
      %v1921 = vsub.f32 %v1889, %v1905
      %v1922 = vsub.f32 %v1890, %v1906
      %v1923 = vsub.f32 %v1891, %v1907
      %v1924 = vsub.f32 %v1892, %v1908
      %v1925 = vsub.f32 %v1893, %v1909
      %v1926 = vsub.f32 %v1894, %v1910
      %v1927 = vsub.f32 %v1895, %v1911
      %v1928 = vsub.f32 %v1896, %v1912
      %v1929 = vsub.f32 %v1897, %v1913
      %v1930 = vadd.f32 %v1914, 1e-05
      %v1931 = vadd.f32 %v1915, 1e-05
      %v1932 = vadd.f32 %v1916, 1e-05
      %v1933 = vadd.f32 %v1917, 1e-05
      %v1934 = vadd.f32 %v1918, 1e-05
      %v1935 = vadd.f32 %v1919, 1e-05
      %v1936 = vadd.f32 %v1920, 1e-05
      %v1937 = vadd.f32 %v1921, 1e-05
      %v1938 = vadd.f32 %v1922, 1e-05
      %v1939 = vadd.f32 %v1923, 1e-05
      %v1940 = vadd.f32 %v1924, 1e-05
      %v1941 = vadd.f32 %v1925, 1e-05
      %v1942 = vadd.f32 %v1926, 1e-05
      %v1943 = vadd.f32 %v1927, 1e-05
      %v1944 = vadd.f32 %v1928, 1e-05
      %v1945 = vadd.f32 %v1929, 1e-05
      %v1946 = vrsqrt.pop %v1930
      %v1947 = vrsqrt.pop %v1931
      %v1948 = vrsqrt.pop %v1932
      %v1949 = vrsqrt.pop %v1933
      %v1950 = vrsqrt.pop %v1934
      %v1951 = vrsqrt.pop %v1935
      %v1952 = vrsqrt.pop %v1936
      %v1953 = vrsqrt.pop %v1937
      %v1954 = vrsqrt.pop %v1938
      %v1955 = vrsqrt.pop %v1939
      %v1956 = vrsqrt.pop %v1940
      %v1957 = vrsqrt.pop %v1941
      %v1958 = vrsqrt.pop %v1942
      %v1959 = vrsqrt.pop %v1943
      %v1960 = vrsqrt.pop %v1944
      %v1961 = vrsqrt.pop %v1945
      %v1962 = vlaneseq
      %v1963 = vshrl.u32 %v1962, 7
      %v1964 = vsub.s32 1, %v1963
      %v1965 = vrot.slane %v1611, %v1964
      %v1966 = vmul.f32 %v1965, %v1946
      %v1967 = vmul.f32 %v1965, %v1947
      %v1968 = vmul.f32 %v1965, %v1948
      %v1969 = vmul.f32 %v1965, %v1949
      %v1970 = vmul.f32 %v1965, %v1950
      %v1971 = vmul.f32 %v1965, %v1951
      %v1972 = vmul.f32 %v1965, %v1952
      %v1973 = vmul.f32 %v1965, %v1953
      %v1974 = vmul.f32 %v1965, %v1954
      %v1975 = vmul.f32 %v1965, %v1955
      %v1976 = vmul.f32 %v1965, %v1956
      %v1977 = vmul.f32 %v1965, %v1957
      %v1978 = vmul.f32 %v1965, %v1958
      %v1979 = vmul.f32 %v1965, %v1959
      %v1980 = vmul.f32 %v1965, %v1960
      %v1981 = vmul.f32 %v1965, %v1961
      %v1982 = vsub.f32 %v1724, %v1866
      %v1983 = vsub.f32 %v1727, %v1867
      %v1984 = vsub.f32 %v1732, %v1868
      %v1985 = vsub.f32 %v1735, %v1869
      %v1986 = vsub.f32 %v1740, %v1870
      %v1987 = vsub.f32 %v1743, %v1871
      %v1988 = vsub.f32 %v1748, %v1872
      %v1989 = vsub.f32 %v1751, %v1873
      %v1990 = vsub.f32 %v1756, %v1874
      %v1991 = vsub.f32 %v1759, %v1875
      %v1992 = vsub.f32 %v1764, %v1876
      %v1993 = vsub.f32 %v1767, %v1877
      %v1994 = vsub.f32 %v1772, %v1878
      %v1995 = vsub.f32 %v1775, %v1879
      %v1996 = vsub.f32 %v1780, %v1880
      %v1997 = vsub.f32 %v1783, %v1881
      %v1998 = vmul.f32 %v1982, %v1966
      %v1999 = vmul.f32 %v1983, %v1967
      %v2000 = vmul.f32 %v1984, %v1968
      %v2001 = vmul.f32 %v1985, %v1969
      %v2002 = vmul.f32 %v1986, %v1970
      %v2003 = vmul.f32 %v1987, %v1971
      %v2004 = vmul.f32 %v1988, %v1972
      %v2005 = vmul.f32 %v1989, %v1973
      %v2006 = vmul.f32 %v1990, %v1974
      %v2007 = vmul.f32 %v1991, %v1975
      %v2008 = vmul.f32 %v1992, %v1976
      %v2009 = vmul.f32 %v1993, %v1977
      %v2010 = vmul.f32 %v1994, %v1978
      %v2011 = vmul.f32 %v1995, %v1979
      %v2012 = vmul.f32 %v1996, %v1980
      %v2013 = vmul.f32 %v1997, %v1981
      %v2014 = vlaneseq
      %v2015 = vshrl.u32 %v2014, 7
      %v2016 = vsub.s32 2, %v2015
      %v2017 = vrot.slane %v1611, %v2016
      %v2018 = vadd.f32 %v1998, %v2017
      %v2019 = vadd.f32 %v1999, %v2017
      %v2020 = vadd.f32 %v2000, %v2017
      %v2021 = vadd.f32 %v2001, %v2017
      %v2022 = vadd.f32 %v2002, %v2017
      %v2023 = vadd.f32 %v2003, %v2017
      %v2024 = vadd.f32 %v2004, %v2017
      %v2025 = vadd.f32 %v2005, %v2017
      %v2026 = vadd.f32 %v2006, %v2017
      %v2027 = vadd.f32 %v2007, %v2017
      %v2028 = vadd.f32 %v2008, %v2017
      %v2029 = vadd.f32 %v2009, %v2017
      %v2030 = vadd.f32 %v2010, %v2017
      %v2031 = vadd.f32 %v2011, %v2017
      %v2032 = vadd.f32 %v2012, %v2017
      %v2033 = vadd.f32 %v2013, %v2017
      %v2034 = vmax.f32 %v2018, 0.0
      %v2035 = vmax.f32 %v2019, 0.0
      %v2036 = vmax.f32 %v2020, 0.0
      %v2037 = vmax.f32 %v2021, 0.0
      %v2038 = vmax.f32 %v2022, 0.0
      %v2039 = vmax.f32 %v2023, 0.0
      %v2040 = vmax.f32 %v2024, 0.0
      %v2041 = vmax.f32 %v2025, 0.0
      %v2042 = vmax.f32 %v2026, 0.0
      %v2043 = vmax.f32 %v2027, 0.0
      %v2044 = vmax.f32 %v2028, 0.0
      %v2045 = vmax.f32 %v2029, 0.0
      %v2046 = vmax.f32 %v2030, 0.0
      %v2047 = vmax.f32 %v2031, 0.0
      %v2048 = vmax.f32 %v2032, 0.0
      %v2049 = vmax.f32 %v2033, 0.0
      %v2050 = vpack.c.bf16 %v2035, %v2034
      %v2051 = vpack.c.bf16 %v2037, %v2036
      %v2052 = vpack.c.bf16 %v2039, %v2038
      %v2053 = vpack.c.bf16 %v2041, %v2040
      %v2054 = vpack.c.bf16 %v2043, %v2042
      %v2055 = vpack.c.bf16 %v2045, %v2044
      %v2056 = vpack.c.bf16 %v2047, %v2046
      %v2057 = vpack.c.bf16 %v2049, %v2048
      %s2058 = scalar_lea.vmem %s4, 64
      %v2059 = vld [vmem:[%s2058] sm:$0xf]
      %v2060 = vld [vmem:[%s2058 + $0x4] sm:$0xf]
      %v2061 = vld [vmem:[%s2058 + $0x8] sm:$0xf]
      %v2062 = vld [vmem:[%s2058 + $0xc] sm:$0xf]
      %v2063 = vld [vmem:[%s2058 + $0x10] sm:$0xf]
      %v2064 = vld [vmem:[%s2058 + $0x14] sm:$0xf]
      %v2065 = vld [vmem:[%s2058 + $0x18] sm:$0xf]
      %v2066 = vld [vmem:[%s2058 + $0x1c] sm:$0xf]
      %v2067 = vld [vmem:[%s2058 + $0x20] sm:$0xf]
      %v2068 = vld [vmem:[%s2058 + $0x24] sm:$0xf]
      %v2069 = vld [vmem:[%s2058 + $0x28] sm:$0xf]
      %v2070 = vld [vmem:[%s2058 + $0x2c] sm:$0xf]
      %v2071 = vld [vmem:[%s2058 + $0x30] sm:$0xf]
      %v2072 = vld [vmem:[%s2058 + $0x34] sm:$0xf]
      %v2073 = vld [vmem:[%s2058 + $0x38] sm:$0xf]
      %v2074 = vld [vmem:[%s2058 + $0x3c] sm:$0xf]
      %v2075 = vlaneseq
      %v2076 = vshrl.u32 %v2075, 7
      %v2077 = vsub.s32 3, %v2076
      %v2078 = vrot.slane %v1611, %v2077
      %v2095 = vunpack.c.l.b16 %v2059
      %v2096 = vunpack.c.l.b16 %v2060
      %v2097 = vunpack.c.l.b16 %v2061
      %v2098 = vunpack.c.l.b16 %v2062
      %v2099 = vunpack.c.l.b16 %v2063
      %v2100 = vunpack.c.l.b16 %v2064
      %v2101 = vunpack.c.l.b16 %v2065
      %v2102 = vunpack.c.l.b16 %v2066
      %v2103 = vunpack.c.l.b16 %v2067
      %v2104 = vunpack.c.l.b16 %v2068
      %v2105 = vunpack.c.l.b16 %v2069
      %v2106 = vunpack.c.l.b16 %v2070
      %v2107 = vunpack.c.l.b16 %v2071
      %v2108 = vunpack.c.l.b16 %v2072
      %v2109 = vunpack.c.l.b16 %v2073
      %v2110 = vunpack.c.l.b16 %v2074
      %v2111 = vpack.c.b16 %v2096, %v2095
      %v2112 = vpack.c.b16 %v2098, %v2097
      %v2113 = vpack.c.b16 %v2100, %v2099
      %v2114 = vpack.c.b16 %v2102, %v2101
      %v2115 = vpack.c.b16 %v2104, %v2103
      %v2116 = vpack.c.b16 %v2106, %v2105
      %v2117 = vpack.c.b16 %v2108, %v2107
      %v2118 = vpack.c.b16 %v2110, %v2109
      %2127 = vmatprep.subr.bf16.mxu0 0
      %2128 = vmatpush1.bf16.msra.mxu0 %v2111
      %2129 = vmatprep.subr.bf16.mxu0 0
      %2130 = vmatpush1.bf16.msra.mxu0 %v2112
      %2131 = vmatprep.subr.bf16.mxu0 0
      %2132 = vmatpush1.bf16.msra.mxu0 %v2113
      %2133 = vmatprep.subr.bf16.mxu0 0
      %2134 = vmatpush1.bf16.msra.mxu0 %v2114
      %2135 = vmatprep.subr.bf16.mxu0 0
      %2136 = vmatpush1.bf16.msra.mxu0 %v2115
      %2137 = vmatprep.subr.bf16.mxu0 0
      %2138 = vmatpush1.bf16.msra.mxu0 %v2116
      %2139 = vmatprep.subr.bf16.mxu0 0
      %2140 = vmatpush1.bf16.msra.mxu0 %v2117
      %2141 = vmatprep.subr.bf16.mxu0 0
      %2142 = vmatpush1.bf16.msra.mxu0 %v2118
      %2143 = vmatprep.subr.bf16.mxu0 0
      %2144 = vmatpush1.bf16.msra.mxu0 0
      %2145 = vmatprep.subr.bf16.mxu0 0
      %2146 = vmatpush1.bf16.msra.mxu0 0
      %2147 = vmatprep.subr.bf16.mxu0 0
      %2148 = vmatpush1.bf16.msra.mxu0 0
      %2149 = vmatprep.subr.bf16.mxu0 0
      %2150 = vmatpush1.bf16.msra.mxu0 0
      %2151 = vmatprep.subr.bf16.mxu0 0
      %2152 = vmatpush1.bf16.msra.mxu0 0
      %2153 = vmatprep.subr.bf16.mxu0 0
      %2154 = vmatpush1.bf16.msra.mxu0 0
      %2155 = vmatprep.subr.bf16.mxu0 0
      %2156 = vmatpush1.bf16.msra.mxu0 0
      %2157 = vmatprep.subr.bf16.mxu0 0
      %2158 = vmatpush1.bf16.msra.mxu0 0
      %2159 = vmatprep.mubr.bf16.mxu0 0
      %2160 = vmatmul.mubr.bf16.gmra.mrb[0].mxu0 %v2050
      %v2161 = vpop.f32.mrb[0].mxu0
      %v2162 = vadd.f32 %v2078, %v2161
      %v2163 = vpop.f32.mrb[0].mxu0
      %v2164 = vpop.f32.mrb[0].mxu0
      %v2165 = vadd.f32 %v2078, %v2164
      %v2166 = vpop.f32.mrb[0].mxu0
      %2167 = vmatprep.mubr.bf16.mxu0 0
      %2168 = vmatmul.mubr.bf16.gmra.mrb[0].mxu0 %v2051
      %v2169 = vpop.f32.mrb[0].mxu0
      %v2170 = vadd.f32 %v2078, %v2169
      %v2171 = vpop.f32.mrb[0].mxu0
      %v2172 = vpop.f32.mrb[0].mxu0
      %v2173 = vadd.f32 %v2078, %v2172
      %v2174 = vpop.f32.mrb[0].mxu0
      %2175 = vmatprep.mubr.bf16.mxu0 0
      %2176 = vmatmul.mubr.bf16.gmra.mrb[0].mxu0 %v2052
      %v2177 = vpop.f32.mrb[0].mxu0
      %v2178 = vadd.f32 %v2078, %v2177
      %v2179 = vpop.f32.mrb[0].mxu0
      %v2180 = vpop.f32.mrb[0].mxu0
      %v2181 = vadd.f32 %v2078, %v2180
      %v2182 = vpop.f32.mrb[0].mxu0
      %2183 = vmatprep.mubr.bf16.mxu0 0
      %2184 = vmatmul.mubr.bf16.gmra.mrb[0].mxu0 %v2053
      %v2185 = vpop.f32.mrb[0].mxu0
      %v2186 = vadd.f32 %v2078, %v2185
      %v2187 = vpop.f32.mrb[0].mxu0
      %v2188 = vpop.f32.mrb[0].mxu0
      %v2189 = vadd.f32 %v2078, %v2188
      %v2190 = vpop.f32.mrb[0].mxu0
      %2191 = vmatprep.mubr.bf16.mxu0 0
      %2192 = vmatmul.mubr.bf16.gmra.mrb[0].mxu0 %v2054
      %v2193 = vpop.f32.mrb[0].mxu0
      %v2194 = vadd.f32 %v2078, %v2193
      %v2195 = vpop.f32.mrb[0].mxu0
      %v2196 = vpop.f32.mrb[0].mxu0
      %v2197 = vadd.f32 %v2078, %v2196
      %v2198 = vpop.f32.mrb[0].mxu0
      %2199 = vmatprep.mubr.bf16.mxu0 0
      %2200 = vmatmul.mubr.bf16.gmra.mrb[0].mxu0 %v2055
      %v2201 = vpop.f32.mrb[0].mxu0
      %v2202 = vadd.f32 %v2078, %v2201
      %v2203 = vpop.f32.mrb[0].mxu0
      %v2204 = vpop.f32.mrb[0].mxu0
      %v2205 = vadd.f32 %v2078, %v2204
      %v2206 = vpop.f32.mrb[0].mxu0
      %2207 = vmatprep.mubr.bf16.mxu0 0
      %2208 = vmatmul.mubr.bf16.gmra.mrb[0].mxu0 %v2056
      %v2209 = vpop.f32.mrb[0].mxu0
      %v2210 = vadd.f32 %v2078, %v2209
      %v2211 = vpop.f32.mrb[0].mxu0
      %v2212 = vpop.f32.mrb[0].mxu0
      %v2213 = vadd.f32 %v2078, %v2212
      %v2214 = vpop.f32.mrb[0].mxu0
      %2215 = vmatprep.mubr.bf16.mxu0 0
      %2216 = vmatmul.mubr.bf16.gmra.mrb[0].mxu0 %v2057
      %v2217 = vpop.f32.mrb[0].mxu0
      %v2218 = vadd.f32 %v2078, %v2217
      %v2219 = vpop.f32.mrb[0].mxu0
      %v2220 = vpop.f32.mrb[0].mxu0
      %v2221 = vadd.f32 %v2078, %v2220
      %v2222 = vpop.f32.mrb[0].mxu0
      %2223 = vdwg.mxu0
      %2224 = vadd.xlane.f32.xlu0 %v2162
      %v2225 = vpop.xlane.xlu0 %2224
      %2226 = vadd.xlane.f32.xlu0 %v2165
      %v2227 = vpop.xlane.xlu0 %2226
      %2228 = vadd.xlane.f32.xlu0 %v2170
      %v2229 = vpop.xlane.xlu0 %2228
      %2230 = vadd.xlane.f32.xlu0 %v2173
      %v2231 = vpop.xlane.xlu0 %2230
      %2232 = vadd.xlane.f32.xlu0 %v2178
      %v2233 = vpop.xlane.xlu0 %2232
      %2234 = vadd.xlane.f32.xlu0 %v2181
      %v2235 = vpop.xlane.xlu0 %2234
      %2236 = vadd.xlane.f32.xlu0 %v2186
      %v2237 = vpop.xlane.xlu0 %2236
      %2238 = vadd.xlane.f32.xlu0 %v2189
      %v2239 = vpop.xlane.xlu0 %2238
      %2240 = vadd.xlane.f32.xlu0 %v2194
      %v2241 = vpop.xlane.xlu0 %2240
      %2242 = vadd.xlane.f32.xlu0 %v2197
      %v2243 = vpop.xlane.xlu0 %2242
      %2244 = vadd.xlane.f32.xlu0 %v2202
      %v2245 = vpop.xlane.xlu0 %2244
      %2246 = vadd.xlane.f32.xlu0 %v2205
      %v2247 = vpop.xlane.xlu0 %2246
      %2248 = vadd.xlane.f32.xlu0 %v2210
      %v2249 = vpop.xlane.xlu0 %2248
      %2250 = vadd.xlane.f32.xlu0 %v2213
      %v2251 = vpop.xlane.xlu0 %2250
      %2252 = vadd.xlane.f32.xlu0 %v2218
      %v2253 = vpop.xlane.xlu0 %2252
      %2254 = vadd.xlane.f32.xlu0 %v2221
      %v2255 = vpop.xlane.xlu0 %2254
      %v2256 = vmul.f32 %v2162, %v2162
      %v2257 = vmul.f32 %v2165, %v2165
      %v2258 = vmul.f32 %v2170, %v2170
      %v2259 = vmul.f32 %v2173, %v2173
      %v2260 = vmul.f32 %v2178, %v2178
      %v2261 = vmul.f32 %v2181, %v2181
      %v2262 = vmul.f32 %v2186, %v2186
      %v2263 = vmul.f32 %v2189, %v2189
      %v2264 = vmul.f32 %v2194, %v2194
      %v2265 = vmul.f32 %v2197, %v2197
      %v2266 = vmul.f32 %v2202, %v2202
      %v2267 = vmul.f32 %v2205, %v2205
      %v2268 = vmul.f32 %v2210, %v2210
      %v2269 = vmul.f32 %v2213, %v2213
      %v2270 = vmul.f32 %v2218, %v2218
      %v2271 = vmul.f32 %v2221, %v2221
      %2272 = vadd.xlane.f32.xlu0 %v2256
      %v2273 = vpop.xlane.xlu0 %2272
      %2274 = vadd.xlane.f32.xlu0 %v2257
      %v2275 = vpop.xlane.xlu0 %2274
      %2276 = vadd.xlane.f32.xlu0 %v2258
      %v2277 = vpop.xlane.xlu0 %2276
      %2278 = vadd.xlane.f32.xlu0 %v2259
      %v2279 = vpop.xlane.xlu0 %2278
      %2280 = vadd.xlane.f32.xlu0 %v2260
      %v2281 = vpop.xlane.xlu0 %2280
      %2282 = vadd.xlane.f32.xlu0 %v2261
      %v2283 = vpop.xlane.xlu0 %2282
      %2284 = vadd.xlane.f32.xlu0 %v2262
      %v2285 = vpop.xlane.xlu0 %2284
      %2286 = vadd.xlane.f32.xlu0 %v2263
      %v2287 = vpop.xlane.xlu0 %2286
      %2288 = vadd.xlane.f32.xlu0 %v2264
      %v2289 = vpop.xlane.xlu0 %2288
      %2290 = vadd.xlane.f32.xlu0 %v2265
      %v2291 = vpop.xlane.xlu0 %2290
      %2292 = vadd.xlane.f32.xlu0 %v2266
      %v2293 = vpop.xlane.xlu0 %2292
      %2294 = vadd.xlane.f32.xlu0 %v2267
      %v2295 = vpop.xlane.xlu0 %2294
      %2296 = vadd.xlane.f32.xlu0 %v2268
      %v2297 = vpop.xlane.xlu0 %2296
      %2298 = vadd.xlane.f32.xlu0 %v2269
      %v2299 = vpop.xlane.xlu0 %2298
      %2300 = vadd.xlane.f32.xlu0 %v2270
      %v2301 = vpop.xlane.xlu0 %2300
      %2302 = vadd.xlane.f32.xlu0 %v2271
      %v2303 = vpop.xlane.xlu0 %2302
      %v2304 = vmul.f32 %v2225, 0.0078125
      %v2305 = vmul.f32 %v2227, 0.0078125
      %v2306 = vmul.f32 %v2229, 0.0078125
      %v2307 = vmul.f32 %v2231, 0.0078125
      %v2308 = vmul.f32 %v2233, 0.0078125
      %v2309 = vmul.f32 %v2235, 0.0078125
      %v2310 = vmul.f32 %v2237, 0.0078125
      %v2311 = vmul.f32 %v2239, 0.0078125
      %v2312 = vmul.f32 %v2241, 0.0078125
      %v2313 = vmul.f32 %v2243, 0.0078125
      %v2314 = vmul.f32 %v2245, 0.0078125
      %v2315 = vmul.f32 %v2247, 0.0078125
      %v2316 = vmul.f32 %v2249, 0.0078125
      %v2317 = vmul.f32 %v2251, 0.0078125
      %v2318 = vmul.f32 %v2253, 0.0078125
      %v2319 = vmul.f32 %v2255, 0.0078125
      %v2320 = vmul.f32 %v2273, 0.0078125
      %v2321 = vmul.f32 %v2275, 0.0078125
      %v2322 = vmul.f32 %v2277, 0.0078125
      %v2323 = vmul.f32 %v2279, 0.0078125
      %v2324 = vmul.f32 %v2281, 0.0078125
      %v2325 = vmul.f32 %v2283, 0.0078125
      %v2326 = vmul.f32 %v2285, 0.0078125
      %v2327 = vmul.f32 %v2287, 0.0078125
      %v2328 = vmul.f32 %v2289, 0.0078125
      %v2329 = vmul.f32 %v2291, 0.0078125
      %v2330 = vmul.f32 %v2293, 0.0078125
      %v2331 = vmul.f32 %v2295, 0.0078125
      %v2332 = vmul.f32 %v2297, 0.0078125
      %v2333 = vmul.f32 %v2299, 0.0078125
      %v2334 = vmul.f32 %v2301, 0.0078125
      %v2335 = vmul.f32 %v2303, 0.0078125
      %v2336 = vmul.f32 %v2304, %v2304
      %v2337 = vmul.f32 %v2305, %v2305
      %v2338 = vmul.f32 %v2306, %v2306
      %v2339 = vmul.f32 %v2307, %v2307
      %v2340 = vmul.f32 %v2308, %v2308
      %v2341 = vmul.f32 %v2309, %v2309
      %v2342 = vmul.f32 %v2310, %v2310
      %v2343 = vmul.f32 %v2311, %v2311
      %v2344 = vmul.f32 %v2312, %v2312
      %v2345 = vmul.f32 %v2313, %v2313
      %v2346 = vmul.f32 %v2314, %v2314
      %v2347 = vmul.f32 %v2315, %v2315
      %v2348 = vmul.f32 %v2316, %v2316
      %v2349 = vmul.f32 %v2317, %v2317
      %v2350 = vmul.f32 %v2318, %v2318
      %v2351 = vmul.f32 %v2319, %v2319
      %v2352 = vsub.f32 %v2320, %v2336
      %v2353 = vsub.f32 %v2321, %v2337
      %v2354 = vsub.f32 %v2322, %v2338
      %v2355 = vsub.f32 %v2323, %v2339
      %v2356 = vsub.f32 %v2324, %v2340
      %v2357 = vsub.f32 %v2325, %v2341
      %v2358 = vsub.f32 %v2326, %v2342
      %v2359 = vsub.f32 %v2327, %v2343
      %v2360 = vsub.f32 %v2328, %v2344
      %v2361 = vsub.f32 %v2329, %v2345
      %v2362 = vsub.f32 %v2330, %v2346
      %v2363 = vsub.f32 %v2331, %v2347
      %v2364 = vsub.f32 %v2332, %v2348
      %v2365 = vsub.f32 %v2333, %v2349
      %v2366 = vsub.f32 %v2334, %v2350
      %v2367 = vsub.f32 %v2335, %v2351
      %v2368 = vadd.f32 %v2352, 1e-05
      %v2369 = vadd.f32 %v2353, 1e-05
      %v2370 = vadd.f32 %v2354, 1e-05
      %v2371 = vadd.f32 %v2355, 1e-05
      %v2372 = vadd.f32 %v2356, 1e-05
      %v2373 = vadd.f32 %v2357, 1e-05
      %v2374 = vadd.f32 %v2358, 1e-05
      %v2375 = vadd.f32 %v2359, 1e-05
      %v2376 = vadd.f32 %v2360, 1e-05
      %v2377 = vadd.f32 %v2361, 1e-05
      %v2378 = vadd.f32 %v2362, 1e-05
      %v2379 = vadd.f32 %v2363, 1e-05
      %v2380 = vadd.f32 %v2364, 1e-05
      %v2381 = vadd.f32 %v2365, 1e-05
      %v2382 = vadd.f32 %v2366, 1e-05
      %v2383 = vadd.f32 %v2367, 1e-05
      %v2384 = vrsqrt.pop %v2368
      %v2385 = vrsqrt.pop %v2369
      %v2386 = vrsqrt.pop %v2370
      %v2387 = vrsqrt.pop %v2371
      %v2388 = vrsqrt.pop %v2372
      %v2389 = vrsqrt.pop %v2373
      %v2390 = vrsqrt.pop %v2374
      %v2391 = vrsqrt.pop %v2375
      %v2392 = vrsqrt.pop %v2376
      %v2393 = vrsqrt.pop %v2377
      %v2394 = vrsqrt.pop %v2378
      %v2395 = vrsqrt.pop %v2379
      %v2396 = vrsqrt.pop %v2380
      %v2397 = vrsqrt.pop %v2381
      %v2398 = vrsqrt.pop %v2382
      %v2399 = vrsqrt.pop %v2383
      %v2400 = vlaneseq
      %v2401 = vshrl.u32 %v2400, 7
      %v2402 = vsub.s32 4, %v2401
      %v2403 = vrot.slane %v1611, %v2402
      %v2404 = vmul.f32 %v2403, %v2384
      %v2405 = vmul.f32 %v2403, %v2385
      %v2406 = vmul.f32 %v2403, %v2386
      %v2407 = vmul.f32 %v2403, %v2387
      %v2408 = vmul.f32 %v2403, %v2388
      %v2409 = vmul.f32 %v2403, %v2389
      %v2410 = vmul.f32 %v2403, %v2390
      %v2411 = vmul.f32 %v2403, %v2391
      %v2412 = vmul.f32 %v2403, %v2392
      %v2413 = vmul.f32 %v2403, %v2393
      %v2414 = vmul.f32 %v2403, %v2394
      %v2415 = vmul.f32 %v2403, %v2395
      %v2416 = vmul.f32 %v2403, %v2396
      %v2417 = vmul.f32 %v2403, %v2397
      %v2418 = vmul.f32 %v2403, %v2398
      %v2419 = vmul.f32 %v2403, %v2399
      %v2420 = vsub.f32 %v2162, %v2304
      %v2421 = vsub.f32 %v2165, %v2305
      %v2422 = vsub.f32 %v2170, %v2306
      %v2423 = vsub.f32 %v2173, %v2307
      %v2424 = vsub.f32 %v2178, %v2308
      %v2425 = vsub.f32 %v2181, %v2309
      %v2426 = vsub.f32 %v2186, %v2310
      %v2427 = vsub.f32 %v2189, %v2311
      %v2428 = vsub.f32 %v2194, %v2312
      %v2429 = vsub.f32 %v2197, %v2313
      %v2430 = vsub.f32 %v2202, %v2314
      %v2431 = vsub.f32 %v2205, %v2315
      %v2432 = vsub.f32 %v2210, %v2316
      %v2433 = vsub.f32 %v2213, %v2317
      %v2434 = vsub.f32 %v2218, %v2318
      %v2435 = vsub.f32 %v2221, %v2319
      %v2436 = vmul.f32 %v2420, %v2404
      %v2437 = vmul.f32 %v2421, %v2405
      %v2438 = vmul.f32 %v2422, %v2406
      %v2439 = vmul.f32 %v2423, %v2407
      %v2440 = vmul.f32 %v2424, %v2408
      %v2441 = vmul.f32 %v2425, %v2409
      %v2442 = vmul.f32 %v2426, %v2410
      %v2443 = vmul.f32 %v2427, %v2411
      %v2444 = vmul.f32 %v2428, %v2412
      %v2445 = vmul.f32 %v2429, %v2413
      %v2446 = vmul.f32 %v2430, %v2414
      %v2447 = vmul.f32 %v2431, %v2415
      %v2448 = vmul.f32 %v2432, %v2416
      %v2449 = vmul.f32 %v2433, %v2417
      %v2450 = vmul.f32 %v2434, %v2418
      %v2451 = vmul.f32 %v2435, %v2419
      %v2452 = vlaneseq
      %v2453 = vshrl.u32 %v2452, 7
      %v2454 = vsub.s32 5, %v2453
      %v2455 = vrot.slane %v1611, %v2454
      %v2456 = vadd.f32 %v2436, %v2455
      %v2457 = vadd.f32 %v2437, %v2455
      %v2458 = vadd.f32 %v2438, %v2455
      %v2459 = vadd.f32 %v2439, %v2455
      %v2460 = vadd.f32 %v2440, %v2455
      %v2461 = vadd.f32 %v2441, %v2455
      %v2462 = vadd.f32 %v2442, %v2455
      %v2463 = vadd.f32 %v2443, %v2455
      %v2464 = vadd.f32 %v2444, %v2455
      %v2465 = vadd.f32 %v2445, %v2455
      %v2466 = vadd.f32 %v2446, %v2455
      %v2467 = vadd.f32 %v2447, %v2455
      %v2468 = vadd.f32 %v2448, %v2455
      %v2469 = vadd.f32 %v2449, %v2455
      %v2470 = vadd.f32 %v2450, %v2455
      %v2471 = vadd.f32 %v2451, %v2455
      %v2472 = vadd.f32 %v1594, %v2456
      %v2473 = vadd.f32 %v1595, %v2457
      %v2474 = vadd.f32 %v1596, %v2458
      %v2475 = vadd.f32 %v1597, %v2459
      %v2476 = vadd.f32 %v1598, %v2460
      %v2477 = vadd.f32 %v1599, %v2461
      %v2478 = vadd.f32 %v1600, %v2462
      %v2479 = vadd.f32 %v1601, %v2463
      %v2480 = vadd.f32 %v1602, %v2464
      %v2481 = vadd.f32 %v1603, %v2465
      %v2482 = vadd.f32 %v1604, %v2466
      %v2483 = vadd.f32 %v1605, %v2467
      %v2484 = vadd.f32 %v1606, %v2468
      %v2485 = vadd.f32 %v1607, %v2469
      %v2486 = vadd.f32 %v1608, %v2470
      %v2487 = vadd.f32 %v1609, %v2471
      %v2488 = vpack.c.bf16 %v2473, %v2472
      %v2489 = vpack.c.bf16 %v2475, %v2474
      %v2490 = vpack.c.bf16 %v2477, %v2476
      %v2491 = vpack.c.bf16 %v2479, %v2478
      %v2492 = vpack.c.bf16 %v2481, %v2480
      %v2493 = vpack.c.bf16 %v2483, %v2482
      %v2494 = vpack.c.bf16 %v2485, %v2484
      %v2495 = vpack.c.bf16 %v2487, %v2486
      %v2496 = vld [vmem:[%s6] sm:$0xf]
      %v2497 = vld [vmem:[%s6 + $0x4] sm:$0xf]
      %v2498 = vld [vmem:[%s6 + $0x8] sm:$0xf]
      %v2499 = vld [vmem:[%s6 + $0xc] sm:$0xf]
      %v2500 = vld [vmem:[%s6 + $0x10] sm:$0xf]
      %v2501 = vld [vmem:[%s6 + $0x14] sm:$0xf]
      %v2502 = vld [vmem:[%s6 + $0x18] sm:$0xf]
      %v2503 = vld [vmem:[%s6 + $0x1c] sm:$0xf]
      %v2504 = vld [vmem:[%s6 + $0x20] sm:$0xf]
      %v2505 = vld [vmem:[%s6 + $0x24] sm:$0xf]
      %v2506 = vld [vmem:[%s6 + $0x28] sm:$0xf]
      %v2507 = vld [vmem:[%s6 + $0x2c] sm:$0xf]
      %v2508 = vld [vmem:[%s6 + $0x30] sm:$0xf]
      %v2509 = vld [vmem:[%s6 + $0x34] sm:$0xf]
      %v2510 = vld [vmem:[%s6 + $0x38] sm:$0xf]
      %v2511 = vld [vmem:[%s6 + $0x3c] sm:$0xf]
      %v2512 = vld [vmem:[#allocation2] sm:$0x1]
      %v2514 = vlaneseq
      %v2515 = vshrl.u32 %v2514, 7
      %v2516 = vsub.s32 0, %v2515
      %v2517 = vrot.slane %v2512, %v2516
      %v2535 = vunpack.c.l.b16 %v2496
      %v2536 = vunpack.c.l.b16 %v2497
      %v2537 = vunpack.c.l.b16 %v2498
      %v2538 = vunpack.c.l.b16 %v2499
      %v2539 = vunpack.c.l.b16 %v2500
      %v2540 = vunpack.c.l.b16 %v2501
      %v2541 = vunpack.c.l.b16 %v2502
      %v2542 = vunpack.c.l.b16 %v2503
      %v2543 = vunpack.c.l.b16 %v2504
      %v2544 = vunpack.c.l.b16 %v2505
      %v2545 = vunpack.c.l.b16 %v2506
      %v2546 = vunpack.c.l.b16 %v2507
      %v2547 = vunpack.c.l.b16 %v2508
      %v2548 = vunpack.c.l.b16 %v2509
      %v2549 = vunpack.c.l.b16 %v2510
      %v2550 = vunpack.c.l.b16 %v2511
      %v2551 = vpack.c.b16 %v2536, %v2535
      %v2552 = vpack.c.b16 %v2538, %v2537
      %v2553 = vpack.c.b16 %v2540, %v2539
      %v2554 = vpack.c.b16 %v2542, %v2541
      %v2555 = vpack.c.b16 %v2544, %v2543
      %v2556 = vpack.c.b16 %v2546, %v2545
      %v2557 = vpack.c.b16 %v2548, %v2547
      %v2558 = vpack.c.b16 %v2550, %v2549
      %2567 = vmatprep.subr.bf16.mxu0 0
      %2568 = vmatpush1.bf16.msra.mxu0 %v2551
      %2569 = vmatprep.subr.bf16.mxu0 0
      %2570 = vmatpush1.bf16.msra.mxu0 %v2552
      %2571 = vmatprep.subr.bf16.mxu0 0
      %2572 = vmatpush1.bf16.msra.mxu0 %v2553
      %2573 = vmatprep.subr.bf16.mxu0 0
      %2574 = vmatpush1.bf16.msra.mxu0 %v2554
      %2575 = vmatprep.subr.bf16.mxu0 0
      %2576 = vmatpush1.bf16.msra.mxu0 %v2555
      %2577 = vmatprep.subr.bf16.mxu0 0
      %2578 = vmatpush1.bf16.msra.mxu0 %v2556
      %2579 = vmatprep.subr.bf16.mxu0 0
      %2580 = vmatpush1.bf16.msra.mxu0 %v2557
      %2581 = vmatprep.subr.bf16.mxu0 0
      %2582 = vmatpush1.bf16.msra.mxu0 %v2558
      %2583 = vmatprep.subr.bf16.mxu0 0
      %2584 = vmatpush1.bf16.msra.mxu0 0
      %2585 = vmatprep.subr.bf16.mxu0 0
      %2586 = vmatpush1.bf16.msra.mxu0 0
      %2587 = vmatprep.subr.bf16.mxu0 0
      %2588 = vmatpush1.bf16.msra.mxu0 0
      %2589 = vmatprep.subr.bf16.mxu0 0
      %2590 = vmatpush1.bf16.msra.mxu0 0
      %2591 = vmatprep.subr.bf16.mxu0 0
      %2592 = vmatpush1.bf16.msra.mxu0 0
      %2593 = vmatprep.subr.bf16.mxu0 0
      %2594 = vmatpush1.bf16.msra.mxu0 0
      %2595 = vmatprep.subr.bf16.mxu0 0
      %2596 = vmatpush1.bf16.msra.mxu0 0
      %2597 = vmatprep.subr.bf16.mxu0 0
      %2598 = vmatpush1.bf16.msra.mxu0 0
      %2599 = vmatprep.mubr.bf16.mxu0 0
      %2600 = vmatmul.mubr.bf16.gmra.mrb[0].mxu0 %v2488
      %v2601 = vpop.f32.mrb[0].mxu0
      %v2602 = vadd.f32 %v2517, %v2601
      %v2603 = vpop.f32.mrb[0].mxu0
      %v2604 = vpop.f32.mrb[0].mxu0
      %v2605 = vadd.f32 %v2517, %v2604
      %v2606 = vpop.f32.mrb[0].mxu0
      %2607 = vmatprep.mubr.bf16.mxu0 0
      %2608 = vmatmul.mubr.bf16.gmra.mrb[0].mxu0 %v2489
      %v2609 = vpop.f32.mrb[0].mxu0
      %v2610 = vadd.f32 %v2517, %v2609
      %v2611 = vpop.f32.mrb[0].mxu0
      %v2612 = vpop.f32.mrb[0].mxu0
      %v2613 = vadd.f32 %v2517, %v2612
      %v2614 = vpop.f32.mrb[0].mxu0
      %2615 = vmatprep.mubr.bf16.mxu0 0
      %2616 = vmatmul.mubr.bf16.gmra.mrb[0].mxu0 %v2490
      %v2617 = vpop.f32.mrb[0].mxu0
      %v2618 = vadd.f32 %v2517, %v2617
      %v2619 = vpop.f32.mrb[0].mxu0
      %v2620 = vpop.f32.mrb[0].mxu0
      %v2621 = vadd.f32 %v2517, %v2620
      %v2622 = vpop.f32.mrb[0].mxu0
      %2623 = vmatprep.mubr.bf16.mxu0 0
      %2624 = vmatmul.mubr.bf16.gmra.mrb[0].mxu0 %v2491
      %v2625 = vpop.f32.mrb[0].mxu0
      %v2626 = vadd.f32 %v2517, %v2625
      %v2627 = vpop.f32.mrb[0].mxu0
      %v2628 = vpop.f32.mrb[0].mxu0
      %v2629 = vadd.f32 %v2517, %v2628
      %v2630 = vpop.f32.mrb[0].mxu0
      %2631 = vmatprep.mubr.bf16.mxu0 0
      %2632 = vmatmul.mubr.bf16.gmra.mrb[0].mxu0 %v2492
      %v2633 = vpop.f32.mrb[0].mxu0
      %v2634 = vadd.f32 %v2517, %v2633
      %v2635 = vpop.f32.mrb[0].mxu0
      %v2636 = vpop.f32.mrb[0].mxu0
      %v2637 = vadd.f32 %v2517, %v2636
      %v2638 = vpop.f32.mrb[0].mxu0
      %2639 = vmatprep.mubr.bf16.mxu0 0
      %2640 = vmatmul.mubr.bf16.gmra.mrb[0].mxu0 %v2493
      %v2641 = vpop.f32.mrb[0].mxu0
      %v2642 = vadd.f32 %v2517, %v2641
      %v2643 = vpop.f32.mrb[0].mxu0
      %v2644 = vpop.f32.mrb[0].mxu0
      %v2645 = vadd.f32 %v2517, %v2644
      %v2646 = vpop.f32.mrb[0].mxu0
      %2647 = vmatprep.mubr.bf16.mxu0 0
      %2648 = vmatmul.mubr.bf16.gmra.mrb[0].mxu0 %v2494
      %v2649 = vpop.f32.mrb[0].mxu0
      %v2650 = vadd.f32 %v2517, %v2649
      %v2651 = vpop.f32.mrb[0].mxu0
      %v2652 = vpop.f32.mrb[0].mxu0
      %v2653 = vadd.f32 %v2517, %v2652
      %v2654 = vpop.f32.mrb[0].mxu0
      %2655 = vmatprep.mubr.bf16.mxu0 0
      %2656 = vmatmul.mubr.bf16.gmra.mrb[0].mxu0 %v2495
      %v2657 = vpop.f32.mrb[0].mxu0
      %v2658 = vadd.f32 %v2517, %v2657
      %v2659 = vpop.f32.mrb[0].mxu0
      %v2660 = vpop.f32.mrb[0].mxu0
      %v2661 = vadd.f32 %v2517, %v2660
      %v2662 = vpop.f32.mrb[0].mxu0
      %2663 = vdwg.mxu0
      %vm2664 = vcmask 7168
      %2665 = vst.msk [vmem:[%s309] sm:$0xff] %vm2664, %v2602
      %2666 = vst.msk [vmem:[%s309 + $0x8] sm:$0xff] %vm2664, %v2605
      %2667 = vst.msk [vmem:[%s309 + $0x10] sm:$0xff] %vm2664, %v2610
      %2668 = vst.msk [vmem:[%s309 + $0x18] sm:$0xff] %vm2664, %v2613
      %2669 = vst.msk [vmem:[%s309 + $0x20] sm:$0xff] %vm2664, %v2618
      %2670 = vst.msk [vmem:[%s309 + $0x28] sm:$0xff] %vm2664, %v2621
      %2671 = vst.msk [vmem:[%s309 + $0x30] sm:$0xff] %vm2664, %v2626
      %2672 = vst.msk [vmem:[%s309 + $0x38] sm:$0xff] %vm2664, %v2629
      %2673 = vst.msk [vmem:[%s309 + $0x40] sm:$0xff] %vm2664, %v2634
      %2674 = vst.msk [vmem:[%s309 + $0x48] sm:$0xff] %vm2664, %v2637
      %2675 = vst.msk [vmem:[%s309 + $0x50] sm:$0xff] %vm2664, %v2642
      %2676 = vst.msk [vmem:[%s309 + $0x58] sm:$0xff] %vm2664, %v2645
      %2677 = vst.msk [vmem:[%s309 + $0x60] sm:$0xff] %vm2664, %v2650
      %2678 = vst.msk [vmem:[%s309 + $0x68] sm:$0xff] %vm2664, %v2653
      %2679 = vst.msk [vmem:[%s309 + $0x70] sm:$0xff] %vm2664, %v2658
      %2680 = vst.msk [vmem:[%s309 + $0x78] sm:$0xff] %vm2664, %v2661
      %s2681 = smul.u32 16, %s21
      %p2682 = scmp.lt.s32.totalorder %s2681, 31
      %s2683 = scalar_select %p2682, %s2681, 31
      %s2684 = smul.addr %s2683, 8
      %s2685 = scalar_lea.vmem %s8, %s2684
      // Predicated region
      $region53: #{tpu_custom_call.1} parent=51 // pred_check
        %p2686 = pneg %p212
      $region54: #{tpu_custom_call.1} parent=51 // pred_check_branch
        %2688 = sbr.rel (%p2686) target = $region56
      $region55: #{tpu_custom_call.1} parent=51 // pred_region
        %s2689 = smul.u32 16, %s21
      $region56: #{tpu_custom_call.1} parent=51 // pred_fallthru
        _
    $region52: #{tpu_custom_call.1} parent=5 // pred_fallthru
      _
    %p2690 = scmp.le.s32.totalorder 2, %s16
    // Predicated region
    $region57: #{tpu_custom_call.1} parent=5 // pred_check
      %p2691 = pneg %p2690
    $region58: #{tpu_custom_call.1} parent=5 // pred_check_branch
      %2693 = sbr.rel (%p2691) target = $region60
    $region59: #{tpu_custom_call.1} parent=5 // pred_region
      %s2694 = ssub.s32 %s16, 2
      // Predicated region
      $region61: #{tpu_custom_call.1} parent=59 // pred_check
        %p2695 = pneg %p218
      $region62: #{tpu_custom_call.1} parent=59 // pred_check_branch
        %2697 = sbr.rel (%p2695) target = $region64
      $region63: #{tpu_custom_call.1} parent=59 // pred_region
        %s2698 = smul.u32 16, %s22
        %p2699 = scmp.lt.s32.totalorder %s2698, 31
        %s2700 = scalar_select %p2699, %s2698, 31
        %s2701 = smul.addr %s2700, 8
        %s2702 = scalar_lea.vmem %s8, %s2701
      $region64: #{tpu_custom_call.1} parent=59 // pred_fallthru
        _
    $region60: #{tpu_custom_call.1} parent=5 // pred_fallthru
      _
  $region6: #{tpu_custom_call.1} parent=0 // loop_footer
    %s20 = sadd.s32 1, %s16
  $region7: #{tpu_custom_call.1} parent=0 // loop_footer_branch
    %15 = sbr.rel target = $region3
  $region8: #{tpu_custom_call.1} parent=0 // loop_exit
    _

</llo_original>
